<compile_context>
chip_gen: v5e
topology: v5e:2x2
jax: 0.10.0
libtpu: 0.0.40
codegen_flags: <defaults>
</compile_context>

<pallas_src>
import jax
import jax.numpy as jnp
from jax import lax
from jax.experimental import pallas as pl
from jax.experimental.pallas import tpu as pltpu

H = 32            # hidden size (bart.config.hidden_size stand-in)
L = 8             # sequence length
N = 3             # number of retrieved / ground-truth passages
NQ = 4            # number of independent queries batched through the grid
TEMPERATURE = 0.96
LR = 0.3
N_STEPS = 5
EPS_COS = 1e-6
EPS_POOL = 1e-9

ROWS = 2 * (N + 1) + 1     # 9 pooled rows per query: [ql(1), q+retr(N+1), q+gt(N+1)]


def _mean_pool(tok, mask):
    # tok (ROWS, L, H), mask (ROWS, L) -> (ROWS, H)   (sentence-transformers mean_pooling)
    m = mask[:, :, None]
    s = jnp.sum(tok * m, axis=1)
    d = jnp.maximum(jnp.sum(m, axis=1), EPS_POOL)
    return s / d


def _cos_grad_rows(Y, C):
    # Row-wise d cos(Y_r, C_r) / d Y_r for (R, H) stacks; C is constant wrt Y.
    dot = jnp.sum(Y * C, axis=1, keepdims=True)
    ny2 = jnp.sum(Y * Y, axis=1, keepdims=True)
    nc2 = jnp.sum(C * C, axis=1, keepdims=True)
    ny = jnp.sqrt(ny2)
    nc = jnp.sqrt(nc2)
    inv_denom = pl.reciprocal(jnp.maximum(ny * nc, EPS_COS), approx=True)
    inv_ny2 = pl.reciprocal(jnp.maximum(ny2, EPS_COS), approx=True)
    cosv = dot * inv_denom
    return C * inv_denom - cosv * Y * inv_ny2


def memory_kernel(tok_ref, mask_ref, param_ref, out_ref):
    tok = tok_ref[0]                        # (ROWS, L, H)
    mask = mask_ref[0]                      # (ROWS, L)

    pooled = _mean_pool(tok, mask)          # (ROWS, H)
    ql_emb = pooled[0:1, :]                                   # (1, H)
    retr_emb = pooled[1:1 + (N + 1), :]                       # (N+1, H) = [query, retr...]
    gt_emb = pooled[1 + (N + 1):ROWS, :]                      # (N+1, H) = [query, gt...]
    query_emb = pooled[1:2, :]                                # (1, H)

    # packed parameter slab: [wq ; wk ; W.T ; b]
    wq = param_ref[0:H, :]
    wk = param_ref[H:2 * H, :]
    wt0 = param_ref[2 * H:3 * H, :]          # transposed nn.Linear weight (in, out)
    b0 = param_ref[3 * H:3 * H + 1, :]       # (1, H)

    # TODO(synk): ScaledDotProductAttentionForMemory source not provided; assumed
    # form softmax((q Wq)(k Wk)^T / temperature).
    qp = jnp.dot(query_emb, wq, preferred_element_type=jnp.float32)    # (1, H)
    kp = jnp.dot(retr_emb, wk, preferred_element_type=jnp.float32)     # (N+1, H)
    scores = lax.dot_general(qp, kp, (((1,), (1,)), ((), ())),
                             preferred_element_type=jnp.float32) / TEMPERATURE
    scores = scores - jnp.max(scores, axis=1, keepdims=True)
    e = jnp.exp(scores)
    attn = e * pl.reciprocal(jnp.sum(e, axis=1, keepdims=True), approx=True)  # (1, N+1)

    Q_argmax = jnp.dot(attn, retr_emb, preferred_element_type=jnp.float32)    # (1, H)
    P_argmax = jnp.dot(attn, gt_emb, preferred_element_type=jnp.float32)      # (1, H)

    # Stack both forward rows once; hoist the single tiny transpose out of the loop.
    X = jnp.concatenate([Q_argmax, query_emb], axis=0)     # (2, H)
    C = jnp.concatenate([P_argmax, query_emb], axis=0)     # (2, H)
    Xt = X.T                                               # (H, 2), computed once

    # Inner SGD loop on the linear layer in transposed layout:
    #   y = x @ Wt + b ;  gradWt = X.T @ dL/dY ;  gradb = sum_rows(dL/dY)
    # loss = 1 - cos(lin(Q_argmax), P_argmax) - cos(lin(query_emb), query_emb)
    Wt = wt0
    b = b0
    for _ in range(N_STEPS):   # static 5-iteration loop
        Y = jnp.dot(X, Wt, preferred_element_type=jnp.float32) + b    # (2, H)
        G = -_cos_grad_rows(Y, C)                                     # dL/dY
        gradWt = jnp.dot(Xt, G, preferred_element_type=jnp.float32)   # (H, H)
        gradb = jnp.sum(G, axis=0, keepdims=True)                     # (1, H)
        Wt = Wt - LR * gradWt
        b = b - LR * gradb

    qt = jnp.dot(query_emb, Wt, preferred_element_type=jnp.float32) + b   # (1, H)
    out_ref[0, :, :] = jnp.concatenate([qt, ql_emb], axis=0)              # (2, H)


def memory_model_forward(tokens, masks, params):
    """tokens (NQ, ROWS, L, H), masks (NQ, ROWS, L), params (3H+1, H)
       -> (query_transformed (NQ, H), query_label_emb (NQ, H))"""
    nq = tokens.shape[0]
    out = pl.pallas_call(
        memory_kernel,
        out_shape=jax.ShapeDtypeStruct((nq, 2, H), jnp.float32),
        grid=(nq,),
        in_specs=[
            pl.BlockSpec((1, ROWS, L, H), lambda b: (b, 0, 0, 0)),
            pl.BlockSpec((1, ROWS, L), lambda b: (b, 0, 0)),
            pl.BlockSpec((3 * H + 1, H), lambda b: (0, 0)),
        ],
        out_specs=pl.BlockSpec((1, 2, H), lambda b: (b, 0, 0)),
        compiler_params=pltpu.CompilerParams(
            dimension_semantics=("parallel",)),
    )(tokens, masks, params)
    return out[:, 0, :], out[:, 1, :]


if __name__ == "__main__":
    key = jax.random.PRNGKey(0)
    kq, kql, kr, kg, kwq, kwk, kw0, kb0 = jax.random.split(key, 8)

    # synthetic (frozen) BART last_hidden_state outputs for NQ independent queries
    q_tok = jax.random.normal(kq, (NQ, 1, L, H), jnp.float32)
    ql_tok = jax.random.normal(kql, (NQ, 1, L, H), jnp.float32)
    r_tok = jax.random.normal(kr, (NQ, N, L, H), jnp.float32)
    g_tok = jax.random.normal(kg, (NQ, N, L, H), jnp.float32)

    # attention masks (deterministic padding patterns)
    pos = jnp.arange(L)[None, None, :]
    q_len = jnp.array([6, 5, 8, 7], jnp.int32)[:NQ]
    ql_len = jnp.array([7, 6, 5, 8], jnp.int32)[:NQ]
    r_len = jnp.array([[5, 8, 6], [7, 4, 8], [6, 6, 5], [8, 7, 4]], jnp.int32)[:NQ]
    g_len = jnp.array([[7, 4, 8], [5, 6, 7], [8, 5, 6], [4, 7, 8]], jnp.int32)[:NQ]
    q_mask = (pos < q_len[:, None, None]).astype(jnp.float32)     # (NQ, 1, L)
    ql_mask = (pos < ql_len[:, None, None]).astype(jnp.float32)   # (NQ, 1, L)
    r_mask = (pos < r_len[:, :, None]).astype(jnp.float32)        # (NQ, N, L)
    g_mask = (pos < g_len[:, :, None]).astype(jnp.float32)        # (NQ, N, L)

    # pack everything: rows = [ql, query+retr (N+1), query+gt (N+1)]  -> one DMA each
    tokens = jnp.concatenate([ql_tok, q_tok, r_tok, q_tok, g_tok], axis=1)   # (NQ, 9, L, H)
    masks = jnp.concatenate([ql_mask, q_mask, r_mask, q_mask, g_mask], axis=1)  # (NQ, 9, L)

    # deterministic parameter init (attention projections + nn.Linear(H, H))
    wq = 0.05 * jax.random.normal(kwq, (H, H), jnp.float32)
    wk = 0.05 * jax.random.normal(kwk, (H, H), jnp.float32)
    w0 = 0.05 * jax.random.normal(kw0, (H, H), jnp.float32)   # torch layout (out, in)
    b0 = 0.05 * jax.random.normal(kb0, (1, H), jnp.float32)
    params = jnp.concatenate([wq, wk, w0.T, b0], axis=0)      # (3H+1, H) slab, W stored transposed

    query_transformed, query_label_emb = memory_model_forward(tokens, masks, params)
    jax.block_until_ready((query_transformed, query_label_emb))
    assert query_transformed.shape == (NQ, H)
    assert query_label_emb.shape == (NQ, H)
    print("KERNEL_OK")
</pallas_src>

<mosaic_0001>
module attributes {stable_mosaic.version = 11 : i64} {
  func.func @memory_kernel(%arg0: i32, %arg1: memref<1x9x8x32xf32, #tpu.memory_space<vmem>>, %arg2: memref<1x9x8xf32, #tpu.memory_space<vmem>>, %arg3: memref<97x32xf32, #tpu.memory_space<vmem>>, %arg4: memref<1x2x32xf32, #tpu.memory_space<vmem>>) attributes {dimension_semantics = [#tpu.dimension_semantics<parallel>], iteration_bounds = array<i64: 4>, scalar_prefetch = 0 : i64, scratch_operands = 0 : i64, tpu.core_type = #tpu.core_type<tc>, window_params = [{transform_indices = @transform_0, window_bounds = array<i64: 1, 9, 8, 32>}, {transform_indices = @transform_1, window_bounds = array<i64: 1, 9, 8>}, {pipeline_mode = #tpu.pipeline_mode<synchronous>, transform_indices = @transform_2, window_bounds = array<i64: 97, 32>}, {transform_indices = @transform_3, window_bounds = array<i64: 1, 2, 32>}]} {
    %c0 = arith.constant 0 : index
    %c0_0 = arith.constant 0 : index
    %c0_1 = arith.constant 0 : index
    %c0_2 = arith.constant 0 : index
    %0 = vector.load %arg1[%c0, %c0_0, %c0_1, %c0_2] : memref<1x9x8x32xf32, #tpu.memory_space<vmem>>, vector<1x9x8x32xf32>
    %1 = vector.shape_cast %0 : vector<1x9x8x32xf32> to vector<9x8x32xf32>
    %c0_3 = arith.constant 0 : index
    %c0_4 = arith.constant 0 : index
    %c0_5 = arith.constant 0 : index
    %2 = vector.load %arg2[%c0_3, %c0_4, %c0_5] : memref<1x9x8xf32, #tpu.memory_space<vmem>>, vector<1x9x8xf32>
    %3 = vector.shape_cast %2 : vector<1x9x8xf32> to vector<9x8xf32>
    %4 = vector.shape_cast %3 : vector<9x8xf32> to vector<9x8x1xf32>
    %5 = vector.broadcast %4 : vector<9x8x1xf32> to vector<9x8x32xf32>
    %6 = arith.mulf %1, %5 : vector<9x8x32xf32>
    %cst = arith.constant dense<0.000000e+00> : vector<9x32xf32>
    %7 = vector.multi_reduction <add>, %6, %cst [1] : vector<9x8x32xf32> to vector<9x32xf32>
    %cst_6 = arith.constant dense<0.000000e+00> : vector<9x1xf32>
    %8 = vector.multi_reduction <add>, %4, %cst_6 [1] : vector<9x8x1xf32> to vector<9x1xf32>
    %cst_7 = arith.constant 9.99999971E-10 : f32
    %9 = vector.broadcast %cst_7 : f32 to vector<9x1xf32>
    %10 = arith.maximumf %8, %9 : vector<9x1xf32>
    %11 = vector.broadcast %10 : vector<9x1xf32> to vector<9x32xf32>
    %12 = arith.divf %7, %11 : vector<9x32xf32>
    %13 = vector.extract_strided_slice %12 {offsets = [0, 0], sizes = [1, 32], strides = [1, 1]} : vector<9x32xf32> to vector<1x32xf32>
    %14 = vector.extract_strided_slice %12 {offsets = [1, 0], sizes = [4, 32], strides = [1, 1]} : vector<9x32xf32> to vector<4x32xf32>
    %15 = vector.extract_strided_slice %12 {offsets = [5, 0], sizes = [4, 32], strides = [1, 1]} : vector<9x32xf32> to vector<4x32xf32>
    %16 = vector.extract_strided_slice %12 {offsets = [1, 0], sizes = [1, 32], strides = [1, 1]} : vector<9x32xf32> to vector<1x32xf32>
    %c0_8 = arith.constant 0 : index
    %c0_9 = arith.constant 0 : index
    %17 = vector.load %arg3[%c0_8, %c0_9] : memref<97x32xf32, #tpu.memory_space<vmem>>, vector<32x32xf32>
    %c32 = arith.constant 32 : index
    %c0_10 = arith.constant 0 : index
    %18 = vector.load %arg3[%c32, %c0_10] : memref<97x32xf32, #tpu.memory_space<vmem>>, vector<32x32xf32>
    %c64 = arith.constant 64 : index
    %c0_11 = arith.constant 0 : index
    %19 = vector.load %arg3[%c64, %c0_11] : memref<97x32xf32, #tpu.memory_space<vmem>>, vector<32x32xf32>
    %c96 = arith.constant 96 : index
    %c0_12 = arith.constant 0 : index
    %20 = vector.load %arg3[%c96, %c0_12] : memref<97x32xf32, #tpu.memory_space<vmem>>, vector<1x32xf32>
    %cst_13 = arith.constant dense<0.000000e+00> : vector<1x32xf32>
    %21 = tpu.matmul %16, %17, %cst_13 {dimension_numbers = #tpu.dot_dimension_numbers<[1], [0], [0], [1], [0, 0, 1, 1], [], []>} : vector<1x32xf32>, vector<32x32xf32>, vector<1x32xf32> -> vector<1x32xf32>
    %cst_14 = arith.constant dense<0.000000e+00> : vector<4x32xf32>
    %22 = tpu.matmul %14, %18, %cst_14 {dimension_numbers = #tpu.dot_dimension_numbers<[1], [0], [0], [1], [0, 0, 1, 1], [], []>} : vector<4x32xf32>, vector<32x32xf32>, vector<4x32xf32> -> vector<4x32xf32>
    %cst_15 = arith.constant dense<0.000000e+00> : vector<1x4xf32>
    %23 = tpu.matmul %21, %22, %cst_15 {dimension_numbers = #tpu.dot_dimension_numbers<[1], [1], [0], [0], [0, 0, 1, 0], [], []>} : vector<1x32xf32>, vector<4x32xf32>, vector<1x4xf32> -> vector<1x4xf32>
    %cst_16 = arith.constant 0.959999978 : f32
    %24 = vector.broadcast %cst_16 : f32 to vector<1x4xf32>
    %25 = arith.divf %23, %24 : vector<1x4xf32>
    %cst_17 = arith.constant dense<0xFF800000> : vector<1xf32>
    %26 = vector.multi_reduction <maximumf>, %25, %cst_17 [1] : vector<1x4xf32> to vector<1xf32>
    %27 = vector.shape_cast %26 : vector<1xf32> to vector<1x1xf32>
    %28 = vector.broadcast %27 : vector<1x1xf32> to vector<1x4xf32>
    %29 = arith.subf %25, %28 : vector<1x4xf32>
    %30 = math.exp %29 : vector<1x4xf32>
    %cst_18 = arith.constant dense<0.000000e+00> : vector<1xf32>
    %31 = vector.multi_reduction <add>, %30, %cst_18 [1] : vector<1x4xf32> to vector<1xf32>
    %32 = vector.shape_cast %31 : vector<1xf32> to vector<1x1xf32>
    %33 = tpu.reciprocal %32 {approx = true} : vector<1x1xf32> -> vector<1x1xf32>
    %34 = vector.broadcast %33 : vector<1x1xf32> to vector<1x4xf32>
    %35 = arith.mulf %30, %34 : vector<1x4xf32>
    %cst_19 = arith.constant dense<0.000000e+00> : vector<1x32xf32>
    %36 = tpu.matmul %35, %14, %cst_19 {dimension_numbers = #tpu.dot_dimension_numbers<[1], [0], [0], [1], [0, 0, 1, 1], [], []>} : vector<1x4xf32>, vector<4x32xf32>, vector<1x32xf32> -> vector<1x32xf32>
    %cst_20 = arith.constant dense<0.000000e+00> : vector<1x32xf32>
    %37 = tpu.matmul %35, %15, %cst_20 {dimension_numbers = #tpu.dot_dimension_numbers<[1], [0], [0], [1], [0, 0, 1, 1], [], []>} : vector<1x4xf32>, vector<4x32xf32>, vector<1x32xf32> -> vector<1x32xf32>
    %38 = tpu.concatenate %36, %16 in 0 : vector<1x32xf32>, vector<1x32xf32> -> vector<2x32xf32>
    %39 = tpu.concatenate %37, %16 in 0 : vector<1x32xf32>, vector<1x32xf32> -> vector<2x32xf32>
    %40 = tpu.transpose %38, [1, 0] : vector<2x32xf32> -> vector<32x2xf32>
    %cst_21 = arith.constant dense<0.000000e+00> : vector<2x32xf32>
    %41 = tpu.matmul %38, %19, %cst_21 {dimension_numbers = #tpu.dot_dimension_numbers<[1], [0], [0], [1], [0, 0, 1, 1], [], []>} : vector<2x32xf32>, vector<32x32xf32>, vector<2x32xf32> -> vector<2x32xf32>
    %42 = vector.broadcast %20 : vector<1x32xf32> to vector<2x32xf32>
    %43 = arith.addf %41, %42 : vector<2x32xf32>
    %44 = arith.mulf %43, %39 : vector<2x32xf32>
    %cst_22 = arith.constant dense<0.000000e+00> : vector<2xf32>
    %45 = vector.multi_reduction <add>, %44, %cst_22 [1] : vector<2x32xf32> to vector<2xf32>
    %46 = vector.shape_cast %45 : vector<2xf32> to vector<2x1xf32>
    %47 = arith.mulf %43, %43 : vector<2x32xf32>
    %cst_23 = arith.constant dense<0.000000e+00> : vector<2xf32>
    %48 = vector.multi_reduction <add>, %47, %cst_23 [1] : vector<2x32xf32> to vector<2xf32>
    %49 = vector.shape_cast %48 : vector<2xf32> to vector<2x1xf32>
    %50 = arith.mulf %39, %39 : vector<2x32xf32>
    %cst_24 = arith.constant dense<0.000000e+00> : vector<2xf32>
    %51 = vector.multi_reduction <add>, %50, %cst_24 [1] : vector<2x32xf32> to vector<2xf32>
    %52 = vector.shape_cast %51 : vector<2xf32> to vector<2x1xf32>
    %53 = math.sqrt %49 : vector<2x1xf32>
    %54 = math.sqrt %52 : vector<2x1xf32>
    %55 = arith.mulf %53, %54 : vector<2x1xf32>
    %cst_25 = arith.constant 9.99999997E-7 : f32
    %56 = vector.broadcast %cst_25 : f32 to vector<2x1xf32>
    %57 = arith.maximumf %55, %56 : vector<2x1xf32>
    %58 = tpu.reciprocal %57 {approx = true} : vector<2x1xf32> -> vector<2x1xf32>
    %cst_26 = arith.constant 9.99999997E-7 : f32
    %59 = vector.broadcast %cst_26 : f32 to vector<2x1xf32>
    %60 = arith.maximumf %49, %59 : vector<2x1xf32>
    %61 = tpu.reciprocal %60 {approx = true} : vector<2x1xf32> -> vector<2x1xf32>
    %62 = arith.mulf %46, %58 : vector<2x1xf32>
    %63 = vector.broadcast %58 : vector<2x1xf32> to vector<2x32xf32>
    %64 = arith.mulf %39, %63 : vector<2x32xf32>
    %65 = vector.broadcast %62 : vector<2x1xf32> to vector<2x32xf32>
    %66 = arith.mulf %65, %43 : vector<2x32xf32>
    %67 = vector.broadcast %61 : vector<2x1xf32> to vector<2x32xf32>
    %68 = arith.mulf %66, %67 : vector<2x32xf32>
    %69 = arith.subf %64, %68 : vector<2x32xf32>
    %cst_27 = arith.constant 0.000000e+00 : f32
    %70 = vector.broadcast %cst_27 : f32 to vector<2x32xf32>
    %71 = arith.subf %70, %69 : vector<2x32xf32>
    %cst_28 = arith.constant dense<0.000000e+00> : vector<32x32xf32>
    %72 = tpu.matmul %40, %71, %cst_28 {dimension_numbers = #tpu.dot_dimension_numbers<[1], [0], [0], [1], [0, 0, 1, 1], [], []>} : vector<32x2xf32>, vector<2x32xf32>, vector<32x32xf32> -> vector<32x32xf32>
    %cst_29 = arith.constant dense<0.000000e+00> : vector<32xf32>
    %73 = vector.multi_reduction <add>, %71, %cst_29 [0] : vector<2x32xf32> to vector<32xf32>
    %74 = vector.shape_cast %73 : vector<32xf32> to vector<1x32xf32>
    %cst_30 = arith.constant 3.000000e-01 : f32
    %75 = vector.broadcast %cst_30 : f32 to vector<32x32xf32>
    %76 = arith.mulf %75, %72 : vector<32x32xf32>
    %77 = arith.subf %19, %76 : vector<32x32xf32>
    %cst_31 = arith.constant 3.000000e-01 : f32
    %78 = vector.broadcast %cst_31 : f32 to vector<1x32xf32>
    %79 = arith.mulf %78, %74 : vector<1x32xf32>
    %80 = arith.subf %20, %79 : vector<1x32xf32>
    %cst_32 = arith.constant dense<0.000000e+00> : vector<2x32xf32>
    %81 = tpu.matmul %38, %77, %cst_32 {dimension_numbers = #tpu.dot_dimension_numbers<[1], [0], [0], [1], [0, 0, 1, 1], [], []>} : vector<2x32xf32>, vector<32x32xf32>, vector<2x32xf32> -> vector<2x32xf32>
    %82 = vector.broadcast %80 : vector<1x32xf32> to vector<2x32xf32>
    %83 = arith.addf %81, %82 : vector<2x32xf32>
    %84 = arith.mulf %83, %39 : vector<2x32xf32>
    %cst_33 = arith.constant dense<0.000000e+00> : vector<2xf32>
    %85 = vector.multi_reduction <add>, %84, %cst_33 [1] : vector<2x32xf32> to vector<2xf32>
    %86 = vector.shape_cast %85 : vector<2xf32> to vector<2x1xf32>
    %87 = arith.mulf %83, %83 : vector<2x32xf32>
    %cst_34 = arith.constant dense<0.000000e+00> : vector<2xf32>
    %88 = vector.multi_reduction <add>, %87, %cst_34 [1] : vector<2x32xf32> to vector<2xf32>
    %89 = vector.shape_cast %88 : vector<2xf32> to vector<2x1xf32>
    %90 = arith.mulf %39, %39 : vector<2x32xf32>
    %cst_35 = arith.constant dense<0.000000e+00> : vector<2xf32>
    %91 = vector.multi_reduction <add>, %90, %cst_35 [1] : vector<2x32xf32> to vector<2xf32>
    %92 = vector.shape_cast %91 : vector<2xf32> to vector<2x1xf32>
    %93 = math.sqrt %89 : vector<2x1xf32>
    %94 = math.sqrt %92 : vector<2x1xf32>
    %95 = arith.mulf %93, %94 : vector<2x1xf32>
    %cst_36 = arith.constant 9.99999997E-7 : f32
    %96 = vector.broadcast %cst_36 : f32 to vector<2x1xf32>
    %97 = arith.maximumf %95, %96 : vector<2x1xf32>
    %98 = tpu.reciprocal %97 {approx = true} : vector<2x1xf32> -> vector<2x1xf32>
    %cst_37 = arith.constant 9.99999997E-7 : f32
    %99 = vector.broadcast %cst_37 : f32 to vector<2x1xf32>
    %100 = arith.maximumf %89, %99 : vector<2x1xf32>
    %101 = tpu.reciprocal %100 {approx = true} : vector<2x1xf32> -> vector<2x1xf32>
    %102 = arith.mulf %86, %98 : vector<2x1xf32>
    %103 = vector.broadcast %98 : vector<2x1xf32> to vector<2x32xf32>
    %104 = arith.mulf %39, %103 : vector<2x32xf32>
    %105 = vector.broadcast %102 : vector<2x1xf32> to vector<2x32xf32>
    %106 = arith.mulf %105, %83 : vector<2x32xf32>
    %107 = vector.broadcast %101 : vector<2x1xf32> to vector<2x32xf32>
    %108 = arith.mulf %106, %107 : vector<2x32xf32>
    %109 = arith.subf %104, %108 : vector<2x32xf32>
    %cst_38 = arith.constant 0.000000e+00 : f32
    %110 = vector.broadcast %cst_38 : f32 to vector<2x32xf32>
    %111 = arith.subf %110, %109 : vector<2x32xf32>
    %cst_39 = arith.constant dense<0.000000e+00> : vector<32x32xf32>
    %112 = tpu.matmul %40, %111, %cst_39 {dimension_numbers = #tpu.dot_dimension_numbers<[1], [0], [0], [1], [0, 0, 1, 1], [], []>} : vector<32x2xf32>, vector<2x32xf32>, vector<32x32xf32> -> vector<32x32xf32>
    %cst_40 = arith.constant dense<0.000000e+00> : vector<32xf32>
    %113 = vector.multi_reduction <add>, %111, %cst_40 [0] : vector<2x32xf32> to vector<32xf32>
    %114 = vector.shape_cast %113 : vector<32xf32> to vector<1x32xf32>
    %cst_41 = arith.constant 3.000000e-01 : f32
    %115 = vector.broadcast %cst_41 : f32 to vector<32x32xf32>
    %116 = arith.mulf %115, %112 : vector<32x32xf32>
    %117 = arith.subf %77, %116 : vector<32x32xf32>
    %cst_42 = arith.constant 3.000000e-01 : f32
    %118 = vector.broadcast %cst_42 : f32 to vector<1x32xf32>
    %119 = arith.mulf %118, %114 : vector<1x32xf32>
    %120 = arith.subf %80, %119 : vector<1x32xf32>
    %cst_43 = arith.constant dense<0.000000e+00> : vector<2x32xf32>
    %121 = tpu.matmul %38, %117, %cst_43 {dimension_numbers = #tpu.dot_dimension_numbers<[1], [0], [0], [1], [0, 0, 1, 1], [], []>} : vector<2x32xf32>, vector<32x32xf32>, vector<2x32xf32> -> vector<2x32xf32>
    %122 = vector.broadcast %120 : vector<1x32xf32> to vector<2x32xf32>
    %123 = arith.addf %121, %122 : vector<2x32xf32>
    %124 = arith.mulf %123, %39 : vector<2x32xf32>
    %cst_44 = arith.constant dense<0.000000e+00> : vector<2xf32>
    %125 = vector.multi_reduction <add>, %124, %cst_44 [1] : vector<2x32xf32> to vector<2xf32>
    %126 = vector.shape_cast %125 : vector<2xf32> to vector<2x1xf32>
    %127 = arith.mulf %123, %123 : vector<2x32xf32>
    %cst_45 = arith.constant dense<0.000000e+00> : vector<2xf32>
    %128 = vector.multi_reduction <add>, %127, %cst_45 [1] : vector<2x32xf32> to vector<2xf32>
    %129 = vector.shape_cast %128 : vector<2xf32> to vector<2x1xf32>
    %130 = arith.mulf %39, %39 : vector<2x32xf32>
    %cst_46 = arith.constant dense<0.000000e+00> : vector<2xf32>
    %131 = vector.multi_reduction <add>, %130, %cst_46 [1] : vector<2x32xf32> to vector<2xf32>
    %132 = vector.shape_cast %131 : vector<2xf32> to vector<2x1xf32>
    %133 = math.sqrt %129 : vector<2x1xf32>
    %134 = math.sqrt %132 : vector<2x1xf32>
    %135 = arith.mulf %133, %134 : vector<2x1xf32>
    %cst_47 = arith.constant 9.99999997E-7 : f32
    %136 = vector.broadcast %cst_47 : f32 to vector<2x1xf32>
    %137 = arith.maximumf %135, %136 : vector<2x1xf32>
    %138 = tpu.reciprocal %137 {approx = true} : vector<2x1xf32> -> vector<2x1xf32>
    %cst_48 = arith.constant 9.99999997E-7 : f32
    %139 = vector.broadcast %cst_48 : f32 to vector<2x1xf32>
    %140 = arith.maximumf %129, %139 : vector<2x1xf32>
    %141 = tpu.reciprocal %140 {approx = true} : vector<2x1xf32> -> vector<2x1xf32>
    %142 = arith.mulf %126, %138 : vector<2x1xf32>
    %143 = vector.broadcast %138 : vector<2x1xf32> to vector<2x32xf32>
    %144 = arith.mulf %39, %143 : vector<2x32xf32>
    %145 = vector.broadcast %142 : vector<2x1xf32> to vector<2x32xf32>
    %146 = arith.mulf %145, %123 : vector<2x32xf32>
    %147 = vector.broadcast %141 : vector<2x1xf32> to vector<2x32xf32>
    %148 = arith.mulf %146, %147 : vector<2x32xf32>
    %149 = arith.subf %144, %148 : vector<2x32xf32>
    %cst_49 = arith.constant 0.000000e+00 : f32
    %150 = vector.broadcast %cst_49 : f32 to vector<2x32xf32>
    %151 = arith.subf %150, %149 : vector<2x32xf32>
    %cst_50 = arith.constant dense<0.000000e+00> : vector<32x32xf32>
    %152 = tpu.matmul %40, %151, %cst_50 {dimension_numbers = #tpu.dot_dimension_numbers<[1], [0], [0], [1], [0, 0, 1, 1], [], []>} : vector<32x2xf32>, vector<2x32xf32>, vector<32x32xf32> -> vector<32x32xf32>
    %cst_51 = arith.constant dense<0.000000e+00> : vector<32xf32>
    %153 = vector.multi_reduction <add>, %151, %cst_51 [0] : vector<2x32xf32> to vector<32xf32>
    %154 = vector.shape_cast %153 : vector<32xf32> to vector<1x32xf32>
    %cst_52 = arith.constant 3.000000e-01 : f32
    %155 = vector.broadcast %cst_52 : f32 to vector<32x32xf32>
    %156 = arith.mulf %155, %152 : vector<32x32xf32>
    %157 = arith.subf %117, %156 : vector<32x32xf32>
    %cst_53 = arith.constant 3.000000e-01 : f32
    %158 = vector.broadcast %cst_53 : f32 to vector<1x32xf32>
    %159 = arith.mulf %158, %154 : vector<1x32xf32>
    %160 = arith.subf %120, %159 : vector<1x32xf32>
    %cst_54 = arith.constant dense<0.000000e+00> : vector<2x32xf32>
    %161 = tpu.matmul %38, %157, %cst_54 {dimension_numbers = #tpu.dot_dimension_numbers<[1], [0], [0], [1], [0, 0, 1, 1], [], []>} : vector<2x32xf32>, vector<32x32xf32>, vector<2x32xf32> -> vector<2x32xf32>
    %162 = vector.broadcast %160 : vector<1x32xf32> to vector<2x32xf32>
    %163 = arith.addf %161, %162 : vector<2x32xf32>
    %164 = arith.mulf %163, %39 : vector<2x32xf32>
    %cst_55 = arith.constant dense<0.000000e+00> : vector<2xf32>
    %165 = vector.multi_reduction <add>, %164, %cst_55 [1] : vector<2x32xf32> to vector<2xf32>
    %166 = vector.shape_cast %165 : vector<2xf32> to vector<2x1xf32>
    %167 = arith.mulf %163, %163 : vector<2x32xf32>
    %cst_56 = arith.constant dense<0.000000e+00> : vector<2xf32>
    %168 = vector.multi_reduction <add>, %167, %cst_56 [1] : vector<2x32xf32> to vector<2xf32>
    %169 = vector.shape_cast %168 : vector<2xf32> to vector<2x1xf32>
    %170 = arith.mulf %39, %39 : vector<2x32xf32>
    %cst_57 = arith.constant dense<0.000000e+00> : vector<2xf32>
    %171 = vector.multi_reduction <add>, %170, %cst_57 [1] : vector<2x32xf32> to vector<2xf32>
    %172 = vector.shape_cast %171 : vector<2xf32> to vector<2x1xf32>
    %173 = math.sqrt %169 : vector<2x1xf32>
    %174 = math.sqrt %172 : vector<2x1xf32>
    %175 = arith.mulf %173, %174 : vector<2x1xf32>
    %cst_58 = arith.constant 9.99999997E-7 : f32
    %176 = vector.broadcast %cst_58 : f32 to vector<2x1xf32>
    %177 = arith.maximumf %175, %176 : vector<2x1xf32>
    %178 = tpu.reciprocal %177 {approx = true} : vector<2x1xf32> -> vector<2x1xf32>
    %cst_59 = arith.constant 9.99999997E-7 : f32
    %179 = vector.broadcast %cst_59 : f32 to vector<2x1xf32>
    %180 = arith.maximumf %169, %179 : vector<2x1xf32>
    %181 = tpu.reciprocal %180 {approx = true} : vector<2x1xf32> -> vector<2x1xf32>
    %182 = arith.mulf %166, %178 : vector<2x1xf32>
    %183 = vector.broadcast %178 : vector<2x1xf32> to vector<2x32xf32>
    %184 = arith.mulf %39, %183 : vector<2x32xf32>
    %185 = vector.broadcast %182 : vector<2x1xf32> to vector<2x32xf32>
    %186 = arith.mulf %185, %163 : vector<2x32xf32>
    %187 = vector.broadcast %181 : vector<2x1xf32> to vector<2x32xf32>
    %188 = arith.mulf %186, %187 : vector<2x32xf32>
    %189 = arith.subf %184, %188 : vector<2x32xf32>
    %cst_60 = arith.constant 0.000000e+00 : f32
    %190 = vector.broadcast %cst_60 : f32 to vector<2x32xf32>
    %191 = arith.subf %190, %189 : vector<2x32xf32>
    %cst_61 = arith.constant dense<0.000000e+00> : vector<32x32xf32>
    %192 = tpu.matmul %40, %191, %cst_61 {dimension_numbers = #tpu.dot_dimension_numbers<[1], [0], [0], [1], [0, 0, 1, 1], [], []>} : vector<32x2xf32>, vector<2x32xf32>, vector<32x32xf32> -> vector<32x32xf32>
    %cst_62 = arith.constant dense<0.000000e+00> : vector<32xf32>
    %193 = vector.multi_reduction <add>, %191, %cst_62 [0] : vector<2x32xf32> to vector<32xf32>
    %194 = vector.shape_cast %193 : vector<32xf32> to vector<1x32xf32>
    %cst_63 = arith.constant 3.000000e-01 : f32
    %195 = vector.broadcast %cst_63 : f32 to vector<32x32xf32>
    %196 = arith.mulf %195, %192 : vector<32x32xf32>
    %197 = arith.subf %157, %196 : vector<32x32xf32>
    %cst_64 = arith.constant 3.000000e-01 : f32
    %198 = vector.broadcast %cst_64 : f32 to vector<1x32xf32>
    %199 = arith.mulf %198, %194 : vector<1x32xf32>
    %200 = arith.subf %160, %199 : vector<1x32xf32>
    %cst_65 = arith.constant dense<0.000000e+00> : vector<2x32xf32>
    %201 = tpu.matmul %38, %197, %cst_65 {dimension_numbers = #tpu.dot_dimension_numbers<[1], [0], [0], [1], [0, 0, 1, 1], [], []>} : vector<2x32xf32>, vector<32x32xf32>, vector<2x32xf32> -> vector<2x32xf32>
    %202 = vector.broadcast %200 : vector<1x32xf32> to vector<2x32xf32>
    %203 = arith.addf %201, %202 : vector<2x32xf32>
    %204 = arith.mulf %203, %39 : vector<2x32xf32>
    %cst_66 = arith.constant dense<0.000000e+00> : vector<2xf32>
    %205 = vector.multi_reduction <add>, %204, %cst_66 [1] : vector<2x32xf32> to vector<2xf32>
    %206 = vector.shape_cast %205 : vector<2xf32> to vector<2x1xf32>
    %207 = arith.mulf %203, %203 : vector<2x32xf32>
    %cst_67 = arith.constant dense<0.000000e+00> : vector<2xf32>
    %208 = vector.multi_reduction <add>, %207, %cst_67 [1] : vector<2x32xf32> to vector<2xf32>
    %209 = vector.shape_cast %208 : vector<2xf32> to vector<2x1xf32>
    %210 = arith.mulf %39, %39 : vector<2x32xf32>
    %cst_68 = arith.constant dense<0.000000e+00> : vector<2xf32>
    %211 = vector.multi_reduction <add>, %210, %cst_68 [1] : vector<2x32xf32> to vector<2xf32>
    %212 = vector.shape_cast %211 : vector<2xf32> to vector<2x1xf32>
    %213 = math.sqrt %209 : vector<2x1xf32>
    %214 = math.sqrt %212 : vector<2x1xf32>
    %215 = arith.mulf %213, %214 : vector<2x1xf32>
    %cst_69 = arith.constant 9.99999997E-7 : f32
    %216 = vector.broadcast %cst_69 : f32 to vector<2x1xf32>
    %217 = arith.maximumf %215, %216 : vector<2x1xf32>
    %218 = tpu.reciprocal %217 {approx = true} : vector<2x1xf32> -> vector<2x1xf32>
    %cst_70 = arith.constant 9.99999997E-7 : f32
    %219 = vector.broadcast %cst_70 : f32 to vector<2x1xf32>
    %220 = arith.maximumf %209, %219 : vector<2x1xf32>
    %221 = tpu.reciprocal %220 {approx = true} : vector<2x1xf32> -> vector<2x1xf32>
    %222 = arith.mulf %206, %218 : vector<2x1xf32>
    %223 = vector.broadcast %218 : vector<2x1xf32> to vector<2x32xf32>
    %224 = arith.mulf %39, %223 : vector<2x32xf32>
    %225 = vector.broadcast %222 : vector<2x1xf32> to vector<2x32xf32>
    %226 = arith.mulf %225, %203 : vector<2x32xf32>
    %227 = vector.broadcast %221 : vector<2x1xf32> to vector<2x32xf32>
    %228 = arith.mulf %226, %227 : vector<2x32xf32>
    %229 = arith.subf %224, %228 : vector<2x32xf32>
    %cst_71 = arith.constant 0.000000e+00 : f32
    %230 = vector.broadcast %cst_71 : f32 to vector<2x32xf32>
    %231 = arith.subf %230, %229 : vector<2x32xf32>
    %cst_72 = arith.constant dense<0.000000e+00> : vector<32x32xf32>
    %232 = tpu.matmul %40, %231, %cst_72 {dimension_numbers = #tpu.dot_dimension_numbers<[1], [0], [0], [1], [0, 0, 1, 1], [], []>} : vector<32x2xf32>, vector<2x32xf32>, vector<32x32xf32> -> vector<32x32xf32>
    %cst_73 = arith.constant dense<0.000000e+00> : vector<32xf32>
    %233 = vector.multi_reduction <add>, %231, %cst_73 [0] : vector<2x32xf32> to vector<32xf32>
    %234 = vector.shape_cast %233 : vector<32xf32> to vector<1x32xf32>
    %cst_74 = arith.constant 3.000000e-01 : f32
    %235 = vector.broadcast %cst_74 : f32 to vector<32x32xf32>
    %236 = arith.mulf %235, %232 : vector<32x32xf32>
    %237 = arith.subf %197, %236 : vector<32x32xf32>
    %cst_75 = arith.constant 3.000000e-01 : f32
    %238 = vector.broadcast %cst_75 : f32 to vector<1x32xf32>
    %239 = arith.mulf %238, %234 : vector<1x32xf32>
    %240 = arith.subf %200, %239 : vector<1x32xf32>
    %cst_76 = arith.constant dense<0.000000e+00> : vector<1x32xf32>
    %241 = tpu.matmul %16, %237, %cst_76 {dimension_numbers = #tpu.dot_dimension_numbers<[1], [0], [0], [1], [0, 0, 1, 1], [], []>} : vector<1x32xf32>, vector<32x32xf32>, vector<1x32xf32> -> vector<1x32xf32>
    %242 = arith.addf %241, %240 : vector<1x32xf32>
    %243 = tpu.concatenate %242, %13 in 0 : vector<1x32xf32>, vector<1x32xf32> -> vector<2x32xf32>
    %c0_77 = arith.constant 0 : index
    %c0_78 = arith.constant 0 : index
    %c0_79 = arith.constant 0 : index
    %244 = vector.load %arg4[%c0_77, %c0_78, %c0_79] : memref<1x2x32xf32, #tpu.memory_space<vmem>>, vector<1x2x32xf32>
    %245 = vector.shape_cast %244 : vector<1x2x32xf32> to vector<2x32xf32>
    %246 = vector.shape_cast %243 : vector<2x32xf32> to vector<1x2x32xf32>
    tpu.vector_store %arg4[%c0_77, %c0_78, %c0_79], %246 {strides = array<i32>} : memref<1x2x32xf32, #tpu.memory_space<vmem>>, vector<1x2x32xf32>,
    return
  }
  func.func @transform_0(%arg0: i32) -> (i32, i32, i32, i32) {
    %c0_i32 = arith.constant 0 : i32
    %c0_i32_0 = arith.constant 0 : i32
    %c0_i32_1 = arith.constant 0 : i32
    %c0_i32_2 = arith.constant 0 : i32
    return %arg0, %c0_i32, %c0_i32_0, %c0_i32_1 : i32, i32, i32, i32
  }
  func.func @transform_1(%arg0: i32) -> (i32, i32, i32) {
    %c0_i32 = arith.constant 0 : i32
    %c0_i32_0 = arith.constant 0 : i32
    %c0_i32_1 = arith.constant 0 : i32
    return %arg0, %c0_i32, %c0_i32_0 : i32, i32, i32
  }
  func.func @transform_2(%arg0: i32) -> (i32, i32) {
    %c0_i32 = arith.constant 0 : i32
    %c0_i32_0 = arith.constant 0 : i32
    %c0_i32_1 = arith.constant 0 : i32
    return %c0_i32, %c0_i32_0 : i32, i32
  }
  func.func @transform_3(%arg0: i32) -> (i32, i32, i32) {
    %c0_i32 = arith.constant 0 : i32
    %c0_i32_0 = arith.constant 0 : i32
    %c0_i32_1 = arith.constant 0 : i32
    return %arg0, %c0_i32, %c0_i32_0 : i32, i32, i32
  }
}

</mosaic_0001>

<llo_original>
// kernel: tpu_custom_call.1
$region0: #{tpu_custom_call.1}
  #allocation0 [shape = 'u32[]', space=smem, size = 0x4, offset = 0x4, fixed_abs, tag = 'smem constant byte address 0x4 - core index']
  #allocation1 [shape = 'u32[72,128]{1,0:T(1,128)}', space=vmem, size = 0x9000, scoped, tag = 'internal scratch']
  %s0 = inlined_call_operand.hbm [shape: f32[4,9,8,32], index: 0, kind: input, shape index: {}]
  %s1 = inlined_call_operand.vmem [shape: f32[4,9,8], index: 1, kind: input, shape index: {}]
  %s2 = inlined_call_operand.vmem [shape: f32[97,32], index: 2, kind: input, shape index: {}]
  %s3 = inlined_call_operand.hbm [shape: f32[4,2,32], index: 3, kind: output, shape index: {}]
  %s4 = sld [smem:[#allocation0]]
  $region49: #{tpu_custom_call.1} parent=0
    _
  %s6 = ssub.s32 1, %s4
  %s7 = scalar_select 0, %s6, %s4
  $region1: #{tpu_custom_call.1} parent=0
    #allocation2 [shape = 'u8[73728]{0}', space=vmem, size = 0x12000, scoped, tag = 'input window, operand 0']
    #allocation3 [shape = 's32[2]{0}', space=sflag, size = 0x8, scoped, tag = 'scoped memory for tpu_custom_call.1']
    #allocation4 [shape = 's32[2]{0}', space=sflag, size = 0x8, scoped, tag = 'scoped memory for tpu_custom_call.1']
    #allocation5 [shape = 'u8[2048]{0}', space=vmem, size = 0x800, scoped, tag = 'output window, operand 0']
    %8 = vsyncpa [#allocation3], 0
    %s9 = scalar_lea.sflag [#allocation3], 1
    %10 = vsyncpa %s9, 0
    %11 = vsyncpa [#allocation4], 0
    %s12 = scalar_lea.sflag [#allocation4], 1
    %13 = vsyncpa %s12, 0
    loop: start=0, step=1, limit=6
    $region2: #{tpu_custom_call.1} parent=1 // loop_pre_header
      _
    $region3: #{tpu_custom_call.1} parent=1 // loop_header
      %s15 = sphi 0, %s19
      %p16 = scmp.ge.s32.totalorder %s15, 6
      %s25 = sphi 0, %s27
      %s28 = sphi 0, %s25
      %s29 = sphi 0, %s28
      %s45 = sphi 0, %s29
      %s51 = sphi 0, %s53
      %s54 = sphi 0, %s51
      %s55 = sphi 0, %s54
      %s71 = sphi 0, %s55
      %s75 = sphi 0, %s75
      %s77 = sphi 0, %s75
      %s78 = sphi 0, %s77
      %s92 = sphi 0, %s78
      %s98 = sphi 0, %s100
      %s101 = sphi 0, %s98
      %s102 = sphi 0, %s101
      %s118 = sphi 0, %s102
    $region4: #{tpu_custom_call.1} parent=1 // loop_header_branch
      %18 = sbr.rel (%p16) target = $region8
    $region5: #{tpu_custom_call.1} parent=1 // loop_body
      %s20 = ssub.s32 %s15, 1
      %s21 = ssub.s32 %s15, 2
      %s22 = sadd.s32 %s15, 1
      %s23 = ssub.s32 %s15, %s22
      %p24 = scmp.eq.s32.totalorder %s23, 0
      %s26 = sadd.s32 %s25, 1
      %s27 = scalar_select %p24, %s25, %s26
      %p30 = pneg %p24
      %p31 = scmp.eq.s32.totalorder %s15, 3
      %p32 = por %p30, %p31
      %p33 = scmp.ne.s32.totalorder %s25, %s28
      %p34 = scmp.eq.s32.totalorder %s15, 0
      %p35 = por %p33, %p34
      %p36 = scmp.ne.s32.totalorder %s25, %s28
      %p37 = scmp.eq.s32.totalorder %s20, 3
      %p38 = por %p36, %p37
      %p39 = scmp.ne.s32.totalorder %s28, %s29
      %p40 = scmp.eq.s32.totalorder %s20, 0
      %p41 = por %p39, %p40
      %p42 = scmp.ne.s32.totalorder %s28, %s29
      %p43 = scmp.eq.s32.totalorder %s21, 3
      %p44 = por %p42, %p43
      %p46 = scmp.ne.s32.totalorder %s29, %s45
      %p47 = scmp.eq.s32.totalorder %s21, 0
      %p48 = por %p46, %p47
      %s49 = ssub.s32 %s15, %s22
      %p50 = scmp.eq.s32.totalorder %s49, 0
      %s52 = sadd.s32 %s51, 1
      %s53 = scalar_select %p50, %s51, %s52
      %p56 = pneg %p50
      %p57 = scmp.eq.s32.totalorder %s15, 3
      %p58 = por %p56, %p57
      %p59 = scmp.ne.s32.totalorder %s51, %s54
      %p60 = scmp.eq.s32.totalorder %s15, 0
      %p61 = por %p59, %p60
      %p62 = scmp.ne.s32.totalorder %s51, %s54
      %p63 = scmp.eq.s32.totalorder %s20, 3
      %p64 = por %p62, %p63
      %p65 = scmp.ne.s32.totalorder %s54, %s55
      %p66 = scmp.eq.s32.totalorder %s20, 0
      %p67 = por %p65, %p66
      %p68 = scmp.ne.s32.totalorder %s54, %s55
      %p69 = scmp.eq.s32.totalorder %s21, 3
      %p70 = por %p68, %p69
      %p72 = scmp.ne.s32.totalorder %s55, %s71
      %p73 = scmp.eq.s32.totalorder %s21, 0
      %p74 = por %p72, %p73
      %s76 = sadd.s32 %s75, 1
      %p79 = scmp.eq.s32.totalorder %s15, 3
      %p80 = scmp.ne.s32.totalorder %s75, %s77
      %p81 = scmp.eq.s32.totalorder %s15, 0
      %p82 = por %p80, %p81
      %p83 = scmp.ne.s32.totalorder %s75, %s77
      %p84 = scmp.eq.s32.totalorder %s20, 3
      %p85 = por %p83, %p84
      %p86 = scmp.ne.s32.totalorder %s77, %s78
      %p87 = scmp.eq.s32.totalorder %s20, 0
      %p88 = por %p86, %p87
      %p89 = scmp.ne.s32.totalorder %s77, %s78
      %p90 = scmp.eq.s32.totalorder %s21, 3
      %p91 = por %p89, %p90
      %p93 = scmp.ne.s32.totalorder %s78, %s92
      %p94 = scmp.eq.s32.totalorder %s21, 0
      %p95 = por %p93, %p94
      %s96 = ssub.s32 %s15, %s22
      %p97 = scmp.eq.s32.totalorder %s96, 0
      %s99 = sadd.s32 %s98, 1
      %s100 = scalar_select %p97, %s98, %s99
      %p103 = pneg %p97
      %p104 = scmp.eq.s32.totalorder %s15, 3
      %p105 = por %p103, %p104
      %p106 = scmp.ne.s32.totalorder %s98, %s101
      %p107 = scmp.eq.s32.totalorder %s15, 0
      %p108 = por %p106, %p107
      %p109 = scmp.ne.s32.totalorder %s98, %s101
      %p110 = scmp.eq.s32.totalorder %s20, 3
      %p111 = por %p109, %p110
      %p112 = scmp.ne.s32.totalorder %s101, %s102
      %p113 = scmp.eq.s32.totalorder %s20, 0
      %p114 = por %p112, %p113
      %p115 = scmp.ne.s32.totalorder %s101, %s102
      %p116 = scmp.eq.s32.totalorder %s21, 3
      %p117 = por %p115, %p116
      %p119 = scmp.ne.s32.totalorder %s102, %s118
      %p120 = scmp.eq.s32.totalorder %s21, 0
      %p121 = por %p119, %p120
      %p122 = scmp.le.s32.totalorder 1, %s15
      %p123 = scmp.lt.s32.totalorder %s15, 5
      %p124 = pnand %p122, %p123
      %p125 = pneg %p124
      // Predicated region
      $region9: #{tpu_custom_call.1} parent=5 // pred_check
        _
      $region10: #{tpu_custom_call.1} parent=5 // pred_check_branch
        %127 = sbr.rel (%p124) target = $region12
      $region11: #{tpu_custom_call.1} parent=5 // pred_region
        %s128 = ssub.s32 %s15, 1
        // Predicated region
        $region13: #{tpu_custom_call.1} parent=11 // pred_check
          %p129 = pneg %p88
        $region14: #{tpu_custom_call.1} parent=11 // pred_check_branch
          %131 = sbr.rel (%p129) target = $region16
        $region15: #{tpu_custom_call.1} parent=11 // pred_region
          _
        $region16: #{tpu_custom_call.1} parent=11 // pred_fallthru
          _
      $region12: #{tpu_custom_call.1} parent=5 // pred_fallthru
        _
      %p132 = scmp.lt.s32.totalorder %s15, 4
      // Predicated region
      $region17: #{tpu_custom_call.1} parent=5 // pred_check
        %p133 = pneg %p132
      $region18: #{tpu_custom_call.1} parent=5 // pred_check_branch
        %135 = sbr.rel (%p133) target = $region20
      $region19: #{tpu_custom_call.1} parent=5 // pred_region
        // Predicated region
        $region21: #{tpu_custom_call.1} parent=19 // pred_check
          %p136 = pneg %p35
        $region22: #{tpu_custom_call.1} parent=19 // pred_check_branch
          %138 = sbr.rel (%p136) target = $region24
        $region23: #{tpu_custom_call.1} parent=19 // pred_region
          %s139 = sand.u32 %s25, 1
          %s140 = scalar_lea.sflag [#allocation3], %s139
          %s141 = sand.u32 %s25, 1
          %s142 = smul.addr %s141, 72
          %s143 = scalar_lea.vmem [#allocation2], %s142
          %145 = vsyncadd %s140, 0
          %s146 = smul.addr %s15, 9
          %s147 = smul.addr %s146, 8
          %s148 = scalar_lea.hbm %s0, %s147
          %s149 = sshll.u32 %s148, 4
          %s150 = int_to_ptr.hbm [resolvable:$true] %s149
          %s151 = sshll.u32 %s143, 4
          %s152 = int_to_ptr.vmem [resolvable:$true] %s151
          %157 = dma.hbm_to_vmem [thread:$0]  %s150, 1152, %s152, %s140, 128, 128, 8
        $region24: #{tpu_custom_call.1} parent=19 // pred_fallthru
          _
        // Predicated region
        $region25: #{tpu_custom_call.1} parent=19 // pred_check
          %p158 = pneg %p61
        $region26: #{tpu_custom_call.1} parent=19 // pred_check_branch
          %160 = sbr.rel (%p158) target = $region28
        $region27: #{tpu_custom_call.1} parent=19 // pred_region
          %p161 = scmp.lt.s32.totalorder %s15, 3
          %s162 = scalar_select %p161, %s15, 3
          %s163 = smul.addr %s162, 2
          %s164 = smul.addr %s163, 8
          %s165 = scalar_lea.vmem %s1, %s164
        $region28: #{tpu_custom_call.1} parent=19 // pred_fallthru
          _
      $region20: #{tpu_custom_call.1} parent=5 // pred_fallthru
        _
      %p166 = scmp.le.s32.totalorder 1, %s15
      %p167 = scmp.lt.s32.totalorder %s15, 5
      %p168 = pnand %p166, %p167
      %p169 = pneg %p168
      // Predicated region
      $region29: #{tpu_custom_call.1} parent=5 // pred_check
        _
      $region30: #{tpu_custom_call.1} parent=5 // pred_check_branch
        %171 = sbr.rel (%p168) target = $region32
      $region31: #{tpu_custom_call.1} parent=5 // pred_region
        %s172 = ssub.s32 %s15, 1
        %s173 = sand.u32 %s28, 1
        %s174 = scalar_lea.sflag [#allocation3], %s173
        %s175 = sand.u32 %s28, 1
        %s176 = smul.addr %s175, 72
        %s177 = scalar_lea.vmem [#allocation2], %s176
        // Predicated region
        $region33: #{tpu_custom_call.1} parent=31 // pred_check
          %p178 = pneg %p41
        $region34: #{tpu_custom_call.1} parent=31 // pred_check_branch
          %180 = sbr.rel (%p178) target = $region36
        $region35: #{tpu_custom_call.1} parent=31 // pred_region
          %182 = dma.done %s174, 1152
        $region36: #{tpu_custom_call.1} parent=31 // pred_fallthru
          _
        %s183 = sand.u32 %s28, 1
        %s184 = scalar_lea.sflag [#allocation3], %s183
        %s185 = sand.u32 %s28, 1
        %s186 = smul.addr %s185, 72
        %s187 = scalar_lea.vmem [#allocation2], %s186
        %p188 = pneg %p41
        %p189 = pneg %p38
        %p190 = scmp.lt.s32.totalorder %s20, 3
        %s191 = scalar_select %p190, %s20, 3
        %s192 = smul.addr %s191, 2
        %s193 = smul.addr %s192, 8
        %s194 = scalar_lea.vmem %s1, %s193
        %p195 = pneg %p67
        %p196 = pneg %p64
        %p197 = pneg %p88
        %p198 = pneg %p85
        %p199 = pneg %p114
        %p200 = pneg %p111
        %s201 = sand.u32 %s101, 1
        %s202 = scalar_lea.sflag [#allocation4], %s201
        %s203 = sand.u32 %s101, 1
        %s204 = smul.addr %s203, 2
        %s205 = scalar_lea.vmem [#allocation5], %s204
        %p206 = scmp.lt.s32.totalorder %s20, 3
        %s207 = scalar_select %p206, %s20, 3
        %s208 = smul.addr %s207, 2
        %s209 = smul.addr %s208, 8
        %s210 = scalar_lea.vmem %s1, %s209
        %v211 = vld [vmem:[%s177] sm:$0xff]
        %v212 = vld [vmem:[%s177 + $0x8] sm:$0xff]
        %v213 = vld [vmem:[%s177 + $0x10] sm:$0xff]
        %v214 = vld [vmem:[%s177 + $0x18] sm:$0xff]
        %v215 = vld [vmem:[%s177 + $0x20] sm:$0xff]
        %v216 = vld [vmem:[%s177 + $0x28] sm:$0xff]
        %v217 = vld [vmem:[%s177 + $0x30] sm:$0xff]
        %v218 = vld [vmem:[%s177 + $0x38] sm:$0xff]
        %v219 = vld [vmem:[%s177 + $0x40] sm:$0xff]
        %v220 = vld [vmem:[%s210] sm:$0xff]
        %v221 = vld [vmem:[%s210 + $0x8] sm:$0x1]
        %v222 = vperm.slane %v220, 0
        %v223 = vlaneseq
        %v224 = vshrl.u32 %v223, 7
        %226 = vset.pattern.permute.xlu0 %v224
        %227 = vperm.xlu0 %226, %v222
        %v228 = vpop.permute.xlu0 %227
        %v229 = vperm.slane %v220, 1
        %v230 = vlaneseq
        %v231 = vshrl.u32 %v230, 7
        %233 = vset.pattern.permute.xlu0 %v231
        %234 = vperm.xlu0 %233, %v229
        %v235 = vpop.permute.xlu0 %234
        %v236 = vperm.slane %v220, 2
        %v237 = vlaneseq
        %v238 = vshrl.u32 %v237, 7
        %240 = vset.pattern.permute.xlu0 %v238
        %241 = vperm.xlu0 %240, %v236
        %v242 = vpop.permute.xlu0 %241
        %v243 = vperm.slane %v220, 3
        %v244 = vlaneseq
        %v245 = vshrl.u32 %v244, 7
        %247 = vset.pattern.permute.xlu0 %v245
        %248 = vperm.xlu0 %247, %v243
        %v249 = vpop.permute.xlu0 %248
        %v250 = vperm.slane %v220, 4
        %v251 = vlaneseq
        %v252 = vshrl.u32 %v251, 7
        %254 = vset.pattern.permute.xlu0 %v252
        %255 = vperm.xlu0 %254, %v250
        %v256 = vpop.permute.xlu0 %255
        %v257 = vperm.slane %v220, 5
        %v258 = vlaneseq
        %v259 = vshrl.u32 %v258, 7
        %261 = vset.pattern.permute.xlu0 %v259
        %262 = vperm.xlu0 %261, %v257
        %v263 = vpop.permute.xlu0 %262
        %v264 = vperm.slane %v220, 6
        %v265 = vlaneseq
        %v266 = vshrl.u32 %v265, 7
        %268 = vset.pattern.permute.xlu0 %v266
        %269 = vperm.xlu0 %268, %v264
        %v270 = vpop.permute.xlu0 %269
        %v271 = vperm.slane %v220, 7
        %v272 = vlaneseq
        %v273 = vshrl.u32 %v272, 7
        %275 = vset.pattern.permute.xlu0 %v273
        %276 = vperm.xlu0 %275, %v271
        %v277 = vpop.permute.xlu0 %276
        %v278 = vperm.slane %v221, 0
        %v279 = vlaneseq
        %v280 = vshrl.u32 %v279, 7
        %282 = vset.pattern.permute.xlu0 %v280
        %283 = vperm.xlu0 %282, %v278
        %v284 = vpop.permute.xlu0 %283
        %v285 = vmul.f32 %v211, %v228
        %v286 = vmul.f32 %v212, %v235
        %v287 = vmul.f32 %v213, %v242
        %v288 = vmul.f32 %v214, %v249
        %v289 = vmul.f32 %v215, %v256
        %v290 = vmul.f32 %v216, %v263
        %v291 = vmul.f32 %v217, %v270
        %v292 = vmul.f32 %v218, %v277
        %v293 = vmul.f32 %v219, %v284
        %vm294 = vcmask 261120
        %v295 = vsel %vm294, %v285, 0.0
        %v296 = vrot.slane %v295, 4
        %v297 = vadd.f32 %v295, %v296
        %v298 = vrot.slane %v297, 2
        %v299 = vadd.f32 %v297, %v298
        %v300 = vrot.slane %v299, 1
        %v301 = vadd.f32 %v299, %v300
        %v302 = vsel %vm294, %v286, 0.0
        %v303 = vrot.slane %v302, 4
        %v304 = vadd.f32 %v302, %v303
        %v305 = vrot.slane %v304, 2
        %v306 = vadd.f32 %v304, %v305
        %v307 = vrot.slane %v306, 1
        %v308 = vadd.f32 %v306, %v307
        %v309 = vsel %vm294, %v287, 0.0
        %v310 = vrot.slane %v309, 4
        %v311 = vadd.f32 %v309, %v310
        %v312 = vrot.slane %v311, 2
        %v313 = vadd.f32 %v311, %v312
        %v314 = vrot.slane %v313, 1
        %v315 = vadd.f32 %v313, %v314
        %v316 = vsel %vm294, %v288, 0.0
        %v317 = vrot.slane %v316, 4
        %v318 = vadd.f32 %v316, %v317
        %v319 = vrot.slane %v318, 2
        %v320 = vadd.f32 %v318, %v319
        %v321 = vrot.slane %v320, 1
        %v322 = vadd.f32 %v320, %v321
        %v323 = vsel %vm294, %v289, 0.0
        %v324 = vrot.slane %v323, 4
        %v325 = vadd.f32 %v323, %v324
        %v326 = vrot.slane %v325, 2
        %v327 = vadd.f32 %v325, %v326
        %v328 = vrot.slane %v327, 1
        %v329 = vadd.f32 %v327, %v328
        %v330 = vsel %vm294, %v290, 0.0
        %v331 = vrot.slane %v330, 4
        %v332 = vadd.f32 %v330, %v331
        %v333 = vrot.slane %v332, 2
        %v334 = vadd.f32 %v332, %v333
        %v335 = vrot.slane %v334, 1
        %v336 = vadd.f32 %v334, %v335
        %v337 = vsel %vm294, %v291, 0.0
        %v338 = vrot.slane %v337, 4
        %v339 = vadd.f32 %v337, %v338
        %v340 = vrot.slane %v339, 2
        %v341 = vadd.f32 %v339, %v340
        %v342 = vrot.slane %v341, 1
        %v343 = vadd.f32 %v341, %v342
        %v344 = vsel %vm294, %v292, 0.0
        %v345 = vrot.slane %v344, 4
        %v346 = vadd.f32 %v344, %v345
        %v347 = vrot.slane %v346, 2
        %v348 = vadd.f32 %v346, %v347
        %v349 = vrot.slane %v348, 1
        %v350 = vadd.f32 %v348, %v349
        %v351 = vsel %vm294, %v293, 0.0
        %v352 = vrot.slane %v351, 4
        %v353 = vadd.f32 %v351, %v352
        %v354 = vrot.slane %v353, 2
        %v355 = vadd.f32 %v353, %v354
        %v356 = vrot.slane %v355, 1
        %v357 = vadd.f32 %v355, %v356
        %v358 = vrot.slane %v228, 4
        %v359 = vadd.f32 %v228, %v358
        %v360 = vrot.slane %v359, 2
        %v361 = vadd.f32 %v359, %v360
        %v362 = vrot.slane %v361, 1
        %v363 = vadd.f32 %v361, %v362
        %v364 = vrot.slane %v235, 4
        %v365 = vadd.f32 %v235, %v364
        %v366 = vrot.slane %v365, 2
        %v367 = vadd.f32 %v365, %v366
        %v368 = vrot.slane %v367, 1
        %v369 = vadd.f32 %v367, %v368
        %v370 = vrot.slane %v242, 4
        %v371 = vadd.f32 %v242, %v370
        %v372 = vrot.slane %v371, 2
        %v373 = vadd.f32 %v371, %v372
        %v374 = vrot.slane %v373, 1
        %v375 = vadd.f32 %v373, %v374
        %v376 = vrot.slane %v249, 4
        %v377 = vadd.f32 %v249, %v376
        %v378 = vrot.slane %v377, 2
        %v379 = vadd.f32 %v377, %v378
        %v380 = vrot.slane %v379, 1
        %v381 = vadd.f32 %v379, %v380
        %v382 = vrot.slane %v256, 4
        %v383 = vadd.f32 %v256, %v382
        %v384 = vrot.slane %v383, 2
        %v385 = vadd.f32 %v383, %v384
        %v386 = vrot.slane %v385, 1
        %v387 = vadd.f32 %v385, %v386
        %v388 = vrot.slane %v263, 4
        %v389 = vadd.f32 %v263, %v388
        %v390 = vrot.slane %v389, 2
        %v391 = vadd.f32 %v389, %v390
        %v392 = vrot.slane %v391, 1
        %v393 = vadd.f32 %v391, %v392
        %v394 = vrot.slane %v270, 4
        %v395 = vadd.f32 %v270, %v394
        %v396 = vrot.slane %v395, 2
        %v397 = vadd.f32 %v395, %v396
        %v398 = vrot.slane %v397, 1
        %v399 = vadd.f32 %v397, %v398
        %v400 = vrot.slane %v277, 4
        %v401 = vadd.f32 %v277, %v400
        %v402 = vrot.slane %v401, 2
        %v403 = vadd.f32 %v401, %v402
        %v404 = vrot.slane %v403, 1
        %v405 = vadd.f32 %v403, %v404
        %v406 = vrot.slane %v284, 4
        %v407 = vadd.f32 %v284, %v406
        %v408 = vrot.slane %v407, 2
        %v409 = vadd.f32 %v407, %v408
        %v410 = vrot.slane %v409, 1
        %v411 = vadd.f32 %v409, %v410
        %v412 = vmax.f32 %v363, 1e-09
        %v413 = vmax.f32 %v369, 1e-09
        %v414 = vmax.f32 %v375, 1e-09
        %v415 = vmax.f32 %v381, 1e-09
        %v416 = vmax.f32 %v387, 1e-09
        %v417 = vmax.f32 %v393, 1e-09
        %v418 = vmax.f32 %v399, 1e-09
        %v419 = vmax.f32 %v405, 1e-09
        %v420 = vmax.f32 %v411, 1e-09
        %v421 = vrcp.pop %v412
        %v422 = vmul.f32 %v412, %v421
        %v423 = vsub.f32 1.0, %v422
        %v424 = vmul.f32 %v421, %v423
        %v425 = vadd.f32 %v421, %v424
        %vm426 = vweird.f32 %v412
        %vm427 = vweird.f32 %v421
        %vm428 = vmor %vm426, %vm427
        %v429 = vsel %vm428, %v421, %v425
        %v430 = vand.u32 2147483647, %v412
        %vm431 = vcmp.eq.f32.partialorder %v430, 8.507059e+37
        %v432 = vand.u32 %v412, 2147483648
        %v433 = vor.u32 1.1754944e-38, %v432
        %v434 = vsel %vm431, %v433, %v429
        %v435 = vmul.f32 %v301, %v434
        %v436 = vrcp.pop %v413
        %v437 = vmul.f32 %v413, %v436
        %v438 = vsub.f32 1.0, %v437
        %v439 = vmul.f32 %v436, %v438
        %v440 = vadd.f32 %v436, %v439
        %vm441 = vweird.f32 %v413
        %vm442 = vweird.f32 %v436
        %vm443 = vmor %vm441, %vm442
        %v444 = vsel %vm443, %v436, %v440
        %v445 = vand.u32 2147483647, %v413
        %vm446 = vcmp.eq.f32.partialorder %v445, 8.507059e+37
        %v447 = vand.u32 %v413, 2147483648
        %v448 = vor.u32 1.1754944e-38, %v447
        %v449 = vsel %vm446, %v448, %v444
        %v450 = vmul.f32 %v308, %v449
        %v451 = vrcp.pop %v414
        %v452 = vmul.f32 %v414, %v451
        %v453 = vsub.f32 1.0, %v452
        %v454 = vmul.f32 %v451, %v453
        %v455 = vadd.f32 %v451, %v454
        %vm456 = vweird.f32 %v414
        %vm457 = vweird.f32 %v451
        %vm458 = vmor %vm456, %vm457
        %v459 = vsel %vm458, %v451, %v455
        %v460 = vand.u32 2147483647, %v414
        %vm461 = vcmp.eq.f32.partialorder %v460, 8.507059e+37
        %v462 = vand.u32 %v414, 2147483648
        %v463 = vor.u32 1.1754944e-38, %v462
        %v464 = vsel %vm461, %v463, %v459
        %v465 = vmul.f32 %v315, %v464
        %v466 = vrcp.pop %v415
        %v467 = vmul.f32 %v415, %v466
        %v468 = vsub.f32 1.0, %v467
        %v469 = vmul.f32 %v466, %v468
        %v470 = vadd.f32 %v466, %v469
        %vm471 = vweird.f32 %v415
        %vm472 = vweird.f32 %v466
        %vm473 = vmor %vm471, %vm472
        %v474 = vsel %vm473, %v466, %v470
        %v475 = vand.u32 2147483647, %v415
        %vm476 = vcmp.eq.f32.partialorder %v475, 8.507059e+37
        %v477 = vand.u32 %v415, 2147483648
        %v478 = vor.u32 1.1754944e-38, %v477
        %v479 = vsel %vm476, %v478, %v474
        %v480 = vmul.f32 %v322, %v479
        %v481 = vrcp.pop %v416
        %v482 = vmul.f32 %v416, %v481
        %v483 = vsub.f32 1.0, %v482
        %v484 = vmul.f32 %v481, %v483
        %v485 = vadd.f32 %v481, %v484
        %vm486 = vweird.f32 %v416
        %vm487 = vweird.f32 %v481
        %vm488 = vmor %vm486, %vm487
        %v489 = vsel %vm488, %v481, %v485
        %v490 = vand.u32 2147483647, %v416
        %vm491 = vcmp.eq.f32.partialorder %v490, 8.507059e+37
        %v492 = vand.u32 %v416, 2147483648
        %v493 = vor.u32 1.1754944e-38, %v492
        %v494 = vsel %vm491, %v493, %v489
        %v495 = vmul.f32 %v329, %v494
        %v496 = vrcp.pop %v417
        %v497 = vmul.f32 %v417, %v496
        %v498 = vsub.f32 1.0, %v497
        %v499 = vmul.f32 %v496, %v498
        %v500 = vadd.f32 %v496, %v499
        %vm501 = vweird.f32 %v417
        %vm502 = vweird.f32 %v496
        %vm503 = vmor %vm501, %vm502
        %v504 = vsel %vm503, %v496, %v500
        %v505 = vand.u32 2147483647, %v417
        %vm506 = vcmp.eq.f32.partialorder %v505, 8.507059e+37
        %v507 = vand.u32 %v417, 2147483648
        %v508 = vor.u32 1.1754944e-38, %v507
        %v509 = vsel %vm506, %v508, %v504
        %v510 = vmul.f32 %v336, %v509
        %v511 = vrcp.pop %v418
        %v512 = vmul.f32 %v418, %v511
        %v513 = vsub.f32 1.0, %v512
        %v514 = vmul.f32 %v511, %v513
        %v515 = vadd.f32 %v511, %v514
        %vm516 = vweird.f32 %v418
        %vm517 = vweird.f32 %v511
        %vm518 = vmor %vm516, %vm517
        %v519 = vsel %vm518, %v511, %v515
        %v520 = vand.u32 2147483647, %v418
        %vm521 = vcmp.eq.f32.partialorder %v520, 8.507059e+37
        %v522 = vand.u32 %v418, 2147483648
        %v523 = vor.u32 1.1754944e-38, %v522
        %v524 = vsel %vm521, %v523, %v519
        %v525 = vmul.f32 %v343, %v524
        %v526 = vrcp.pop %v419
        %v527 = vmul.f32 %v419, %v526
        %v528 = vsub.f32 1.0, %v527
        %v529 = vmul.f32 %v526, %v528
        %v530 = vadd.f32 %v526, %v529
        %vm531 = vweird.f32 %v419
        %vm532 = vweird.f32 %v526
        %vm533 = vmor %vm531, %vm532
        %v534 = vsel %vm533, %v526, %v530
        %v535 = vand.u32 2147483647, %v419
        %vm536 = vcmp.eq.f32.partialorder %v535, 8.507059e+37
        %v537 = vand.u32 %v419, 2147483648
        %v538 = vor.u32 1.1754944e-38, %v537
        %v539 = vsel %vm536, %v538, %v534
        %v540 = vmul.f32 %v350, %v539
        %v541 = vrcp.pop %v420
        %v542 = vmul.f32 %v420, %v541
        %v543 = vsub.f32 1.0, %v542
        %v544 = vmul.f32 %v541, %v543
        %v545 = vadd.f32 %v541, %v544
        %vm546 = vweird.f32 %v420
        %vm547 = vweird.f32 %v541
        %vm548 = vmor %vm546, %vm547
        %v549 = vsel %vm548, %v541, %v545
        %v550 = vand.u32 2147483647, %v420
        %vm551 = vcmp.eq.f32.partialorder %v550, 8.507059e+37
        %v552 = vand.u32 %v420, 2147483648
        %v553 = vor.u32 1.1754944e-38, %v552
        %v554 = vsel %vm551, %v553, %v549
        %v555 = vmul.f32 %v357, %v554
        %v556 = vld [vmem:[%s2] sm:$0xff]
        %v557 = vld [vmem:[%s2 + $0x8] sm:$0xff]
        %v558 = vld [vmem:[%s2 + $0x10] sm:$0xff]
        %v559 = vld [vmem:[%s2 + $0x18] sm:$0xff]
        %v560 = vld [vmem:[%s2 + $0x20] sm:$0xff]
        %v561 = vld [vmem:[%s2 + $0x28] sm:$0xff]
        %v562 = vld [vmem:[%s2 + $0x30] sm:$0xff]
        %v563 = vld [vmem:[%s2 + $0x38] sm:$0xff]
        %v564 = vld [vmem:[%s2 + $0x40] sm:$0xff]
        %v565 = vld [vmem:[%s2 + $0x48] sm:$0xff]
        %v566 = vld [vmem:[%s2 + $0x50] sm:$0xff]
        %v567 = vld [vmem:[%s2 + $0x58] sm:$0xff]
        %v568 = vld [vmem:[%s2 + $0x60] sm:$0x1]
        %v570 = vsel %vm294, %v450, 0
        %572 = vmatpush.msra.mxu0 0.0
        %573 = vmatpush.msra.mxu0 0.0
        %574 = vmatpush.msra.mxu0 0.0
        %575 = vmatpush.msra.mxu0 0.0
        %576 = vmatpush.msra.mxu0 0.0
        %577 = vmatpush.msra.mxu0 0.0
        %578 = vmatpush.msra.mxu0 0.0
        %579 = vmatpush.msra.mxu0 0.0
        %580 = vmatpush.msra.mxu0 0.0
        %581 = vmatpush.msra.mxu0 0.0
        %582 = vmatpush.msra.mxu0 0.0
        %583 = vmatpush.msra.mxu0 0.0
        %584 = vmatpush.msra.mxu0 %v559
        %585 = vmatpush.msra.mxu0 %v558
        %586 = vmatpush.msra.mxu0 %v557
        %587 = vmatpush.msra.mxu0 %v556
        %588 = vmatmul.f32.gmra.mxu0 %v570
        %v589 = vpop.f32.mrf.mxu0
        %v590 = vadd.f32 0.0, %v589
        %591 = vdwg.mxu0
        %vm595 = vcmask 1041409
        %v596 = vsel %vm595, %v465, %v450
        %vm597 = vcmask 1042434
        %v598 = vsel %vm597, %v480, %v596
        %vm599 = vcmask 1043459
        %v600 = vsel %vm599, %v495, %v598
        %v601 = vsel %vm294, %v600, 0
        %603 = vmatpush.msra.mxu0 0.0
        %604 = vmatpush.msra.mxu0 0.0
        %605 = vmatpush.msra.mxu0 0.0
        %606 = vmatpush.msra.mxu0 0.0
        %607 = vmatpush.msra.mxu0 0.0
        %608 = vmatpush.msra.mxu0 0.0
        %609 = vmatpush.msra.mxu0 0.0
        %610 = vmatpush.msra.mxu0 0.0
        %611 = vmatpush.msra.mxu0 0.0
        %612 = vmatpush.msra.mxu0 0.0
        %613 = vmatpush.msra.mxu0 0.0
        %614 = vmatpush.msra.mxu0 0.0
        %615 = vmatpush.msra.mxu0 %v563
        %616 = vmatpush.msra.mxu0 %v562
        %617 = vmatpush.msra.mxu0 %v561
        %618 = vmatpush.msra.mxu0 %v560
        %619 = vmatmul.f32.gmra.mxu0 %v601
        %v620 = vpop.f32.mrf.mxu0
        %v621 = vadd.f32 0.0, %v620
        %622 = vdwg.mxu0
        %v624 = vsel %vm294, %v590, 0
        %v627 = vsel %vm294, %v621, 0
        %629 = vmatpush.xpose.msra.mxu0 0.0
        %630 = vmatpush.xpose.msra.mxu0 0.0
        %631 = vmatpush.xpose.msra.mxu0 0.0
        %632 = vmatpush.xpose.msra.mxu0 0.0
        %633 = vmatpush.xpose.msra.mxu0 0.0
        %634 = vmatpush.xpose.msra.mxu0 0.0
        %635 = vmatpush.xpose.msra.mxu0 0.0
        %636 = vmatpush.xpose.msra.mxu0 0.0
        %637 = vmatpush.xpose.msra.mxu0 0.0
        %638 = vmatpush.xpose.msra.mxu0 0.0
        %639 = vmatpush.xpose.msra.mxu0 0.0
        %640 = vmatpush.xpose.msra.mxu0 0.0
        %641 = vmatpush.xpose.msra.mxu0 0.0
        %642 = vmatpush.xpose.msra.mxu0 0.0
        %643 = vmatpush.xpose.msra.mxu0 0.0
        %644 = vmatpush.xpose.msra.mxu0 %v627
        %645 = vmatmul.f32.gmra.mxu0 %v624
        %v646 = vpop.f32.mrf.mxu0
        %v647 = vadd.f32 0.0, %v646
        %648 = vdwg.mxu0
        %v649 = vrcp.pop 0.96
        %v650 = vmul.f32 0.96, %v649
        %v651 = vsub.f32 1.0, %v650
        %v652 = vmul.f32 %v649, %v651
        %v653 = vadd.f32 %v649, %v652
        %vm654 = vweird.f32 %v649
        %v655 = vsel %vm654, %v649, %v653
        %v656 = vmul.f32 %v647, %v655
        %vm657 = vcmask 24576
        %v658 = vsel %vm657, %v656, -inf
        %659 = vmax.xlane.f32.xlu0 %v658
        %v660 = vpop.xlane.xlu0 %659
        %v661 = vsub.f32 %v656, %v660
        %v662 = vmul.f32 %v661, 1.442695
        %v663 = vpow.pop %v662
        %v664 = vsel %vm657, %v663, 0.0
        %665 = vadd.xlane.f32.xlu0 %v664
        %v666 = vpop.xlane.xlu0 %665
        %v667 = vrcp.pop %v666
        %v668 = vmul.f32 %v663, %v667
        %vm669 = vcmask 31744
        %v671 = vsel %vm669, %v668, 0
        %vm673 = vcmask 1043456
        %v674 = vsel %vm673, %v600, 0
        %676 = vmatpush.msra.mxu0 0.0
        %677 = vmatpush.msra.mxu0 0.0
        %678 = vmatpush.msra.mxu0 0.0
        %679 = vmatpush.msra.mxu0 0.0
        %680 = vmatpush.msra.mxu0 0.0
        %681 = vmatpush.msra.mxu0 0.0
        %682 = vmatpush.msra.mxu0 0.0
        %683 = vmatpush.msra.mxu0 0.0
        %684 = vmatpush.msra.mxu0 0.0
        %685 = vmatpush.msra.mxu0 0.0
        %686 = vmatpush.msra.mxu0 0.0
        %687 = vmatpush.msra.mxu0 0.0
        %688 = vmatpush.msra.mxu0 0.0
        %689 = vmatpush.msra.mxu0 0.0
        %690 = vmatpush.msra.mxu0 0.0
        %691 = vmatpush.msra.mxu0 %v674
        %692 = vmatmul.f32.gmra.mxu0 %v671
        %v693 = vpop.f32.mrf.mxu0
        %v694 = vadd.f32 0.0, %v693
        %695 = vdwg.mxu0
        %v700 = vsel %vm595, %v525, %v510
        %v701 = vsel %vm597, %v540, %v700
        %v702 = vsel %vm599, %v555, %v701
        %v703 = vsel %vm673, %v702, 0
        %705 = vmatpush.msra.mxu0 0.0
        %706 = vmatpush.msra.mxu0 0.0
        %707 = vmatpush.msra.mxu0 0.0
        %708 = vmatpush.msra.mxu0 0.0
        %709 = vmatpush.msra.mxu0 0.0
        %710 = vmatpush.msra.mxu0 0.0
        %711 = vmatpush.msra.mxu0 0.0
        %712 = vmatpush.msra.mxu0 0.0
        %713 = vmatpush.msra.mxu0 0.0
        %714 = vmatpush.msra.mxu0 0.0
        %715 = vmatpush.msra.mxu0 0.0
        %716 = vmatpush.msra.mxu0 0.0
        %717 = vmatpush.msra.mxu0 0.0
        %718 = vmatpush.msra.mxu0 0.0
        %719 = vmatpush.msra.mxu0 0.0
        %720 = vmatpush.msra.mxu0 %v703
        %721 = vmatmul.f32.gmra.mxu0 %v671
        %v722 = vpop.f32.mrf.mxu0
        %v723 = vadd.f32 0.0, %v722
        %724 = vdwg.mxu0
        %vm725 = vcmask 1040384
        %v726 = vsel %vm725, %v694, %v450
        %v727 = vsel %vm725, %v723, %v450
        %728 = vxpose.xlu0.b32.start [1/16] %v726, 128
        %729 = vxpose.xlu0.b32.cont [2/16] 0.0, 128
        %730 = vxpose.xlu0.b32.cont [3/16] 0.0, 128
        %731 = vxpose.xlu0.b32.cont [4/16] 0.0, 128
        %732 = vxpose.xlu0.b32.cont [5/16] 0.0, 128
        %733 = vxpose.xlu0.b32.cont [6/16] 0.0, 128
        %734 = vxpose.xlu0.b32.cont [7/16] 0.0, 128
        %735 = vxpose.xlu0.b32.cont [8/16] 0.0, 128
        %736 = vxpose.xlu0.b32.cont [9/16] 0.0, 128
        %737 = vxpose.xlu0.b32.cont [10/16] 0.0, 128
        %738 = vxpose.xlu0.b32.cont [11/16] 0.0, 128
        %739 = vxpose.xlu0.b32.cont [12/16] 0.0, 128
        %740 = vxpose.xlu0.b32.cont [13/16] 0.0, 128
        %741 = vxpose.xlu0.b32.cont [14/16] 0.0, 128
        %742 = vxpose.xlu0.b32.cont [15/16] 0.0, 128
        %743 = vxpose.xlu0.b32.end [16/16] 0.0, 128
        %v744 = vpop.trf.xlu0
        %v745 = vpop.trf.xlu0
        %v746 = vpop.trf.xlu0
        %v747 = vpop.trf.xlu0
        %v748 = vpop.trf.xlu0
        %v749 = vpop.trf.xlu0
        %v750 = vpop.trf.xlu0
        %v751 = vpop.trf.xlu0
        %v752 = vpop.trf.xlu0
        %v753 = vpop.trf.xlu0
        %v754 = vpop.trf.xlu0
        %v755 = vpop.trf.xlu0
        %v756 = vpop.trf.xlu0
        %v757 = vpop.trf.xlu0
        %v758 = vpop.trf.xlu0
        %v759 = vpop.trf.xlu0
        %v760 = vperm.slane %v568, 0
        %v762 = vsel %vm294, %v726, 0
        %764 = vmatpush.msra.mxu0 0.0
        %765 = vmatpush.msra.mxu0 0.0
        %766 = vmatpush.msra.mxu0 0.0
        %767 = vmatpush.msra.mxu0 0.0
        %768 = vmatpush.msra.mxu0 0.0
        %769 = vmatpush.msra.mxu0 0.0
        %770 = vmatpush.msra.mxu0 0.0
        %771 = vmatpush.msra.mxu0 0.0
        %772 = vmatpush.msra.mxu0 0.0
        %773 = vmatpush.msra.mxu0 0.0
        %774 = vmatpush.msra.mxu0 0.0
        %775 = vmatpush.msra.mxu0 0.0
        %776 = vmatpush.msra.mxu0 %v567
        %777 = vmatpush.msra.mxu0 %v566
        %778 = vmatpush.msra.mxu0 %v565
        %779 = vmatpush.msra.mxu0 %v564
        %780 = vmatmul.f32.gmra.mxu0 %v762
        %v781 = vpop.f32.mrf.mxu0
        %v782 = vadd.f32 %v760, %v781
        %783 = vdwg.mxu0
        %v784 = vmul.f32 %v782, %v727
        %vm785 = vcmask 254976
        %v786 = vsel %vm785, %v784, 0.0
        %787 = vadd.xlane.f32.xlu0 %v786
        %v788 = vpop.xlane.xlu0 %787
        %v789 = vmul.f32 %v782, %v782
        %v790 = vsel %vm785, %v789, 0.0
        %791 = vadd.xlane.f32.xlu0 %v790
        %v792 = vpop.xlane.xlu0 %791
        %v793 = vmul.f32 %v727, %v727
        %v794 = vsel %vm785, %v793, 0.0
        %795 = vadd.xlane.f32.xlu0 %v794
        %v796 = vpop.xlane.xlu0 %795
        %v797 = vrsqrt.pop %v792
        %v798 = vmul.f32 %v797, %v792
        %v799 = vmul.f32 %v798, %v797
        %v800 = vmul.f32 0.5, %v799
        %v801 = vsub.f32 1.5, %v800
        %v802 = vmul.f32 %v797, %v801
        %v803 = vmul.f32 %v792, %v802
        %vm804 = vcmp.eq.f32.partialorder %v792, inf
        %v805 = vsel %vm804, %v792, %v803
        %vm806 = vcmp.eq.f32.partialorder %v792, 0.0
        %v807 = vand.u32 %v792, 2147483648
        %v808 = vsel %vm806, %v807, %v805
        %v809 = vrsqrt.pop %v796
        %v810 = vmul.f32 %v809, %v796
        %v811 = vmul.f32 %v810, %v809
        %v812 = vmul.f32 0.5, %v811
        %v813 = vsub.f32 1.5, %v812
        %v814 = vmul.f32 %v809, %v813
        %v815 = vmul.f32 %v796, %v814
        %vm816 = vcmp.eq.f32.partialorder %v796, inf
        %v817 = vsel %vm816, %v796, %v815
        %vm818 = vcmp.eq.f32.partialorder %v796, 0.0
        %v819 = vand.u32 %v796, 2147483648
        %v820 = vsel %vm818, %v819, %v817
        %v821 = vmul.f32 %v808, %v820
        %v822 = vmax.f32 %v821, 1e-06
        %v823 = vrcp.pop %v822
        %v824 = vmax.f32 %v792, 1e-06
        %v825 = vrcp.pop %v824
        %v826 = vmul.f32 %v788, %v823
        %v827 = vmul.f32 %v727, %v823
        %v828 = vmul.f32 %v826, %v782
        %v829 = vmul.f32 %v828, %v825
        %v830 = vsub.f32 %v827, %v829
        %v831 = vsub.f32 0.0, %v830
        %vm832 = vcmask 15360
        %v834 = vsel %vm832, %v744, 0
        %v837 = vsel %vm832, %v745, 0
        %v840 = vsel %vm832, %v746, 0
        %v843 = vsel %vm832, %v747, 0
        %vm845 = vcmask 1041408
        %v847 = vsel %vm845, %v831, 0
        %849 = vmatpush.msra.mxu0 0.0
        %850 = vmatpush.msra.mxu0 0.0
        %851 = vmatpush.msra.mxu0 0.0
        %852 = vmatpush.msra.mxu0 0.0
        %853 = vmatpush.msra.mxu0 0.0
        %854 = vmatpush.msra.mxu0 0.0
        %855 = vmatpush.msra.mxu0 0.0
        %856 = vmatpush.msra.mxu0 0.0
        %857 = vmatpush.msra.mxu0 0.0
        %858 = vmatpush.msra.mxu0 0.0
        %859 = vmatpush.msra.mxu0 0.0
        %860 = vmatpush.msra.mxu0 0.0
        %861 = vmatpush.msra.mxu0 0.0
        %862 = vmatpush.msra.mxu0 0.0
        %863 = vmatpush.msra.mxu0 0.0
        %864 = vmatpush.msra.mxu0 %v847
        %865 = vmatmul.f32.gmra.mxu0 %v834
        %v866 = vpop.f32.mrf.mxu0
        %v867 = vadd.f32 0.0, %v866
        %868 = vmatmul.f32.gmra.mxu0 %v837
        %v869 = vpop.f32.mrf.mxu0
        %v870 = vadd.f32 0.0, %v869
        %871 = vmatmul.f32.gmra.mxu0 %v840
        %v872 = vpop.f32.mrf.mxu0
        %v873 = vadd.f32 0.0, %v872
        %874 = vmatmul.f32.gmra.mxu0 %v843
        %v875 = vpop.f32.mrf.mxu0
        %v876 = vadd.f32 0.0, %v875
        %877 = vdwg.mxu0
        %v878 = vsel %vm785, %v831, 0.0
        %v879 = vrot.slane %v878, 4
        %v880 = vadd.f32 %v878, %v879
        %v881 = vrot.slane %v880, 2
        %v882 = vadd.f32 %v880, %v881
        %v883 = vrot.slane %v882, 1
        %v884 = vadd.f32 %v882, %v883
        %v885 = vmul.f32 %v867, 0.3
        %v886 = vmul.f32 %v870, 0.3
        %v887 = vmul.f32 %v873, 0.3
        %v888 = vmul.f32 %v876, 0.3
        %v889 = vsub.f32 %v564, %v885
        %v890 = vsub.f32 %v565, %v886
        %v891 = vsub.f32 %v566, %v887
        %v892 = vsub.f32 %v567, %v888
        %v893 = vmul.f32 %v884, 0.3
        %v894 = vsub.f32 %v568, %v893
        %v895 = vperm.slane %v894, 0
        %896 = vmatpush.msra.mxu0 0.0
        %897 = vmatpush.msra.mxu0 0.0
        %898 = vmatpush.msra.mxu0 0.0
        %899 = vmatpush.msra.mxu0 0.0
        %900 = vmatpush.msra.mxu0 0.0
        %901 = vmatpush.msra.mxu0 0.0
        %902 = vmatpush.msra.mxu0 0.0
        %903 = vmatpush.msra.mxu0 0.0
        %904 = vmatpush.msra.mxu0 0.0
        %905 = vmatpush.msra.mxu0 0.0
        %906 = vmatpush.msra.mxu0 0.0
        %907 = vmatpush.msra.mxu0 0.0
        %908 = vmatpush.msra.mxu0 %v892
        %909 = vmatpush.msra.mxu0 %v891
        %910 = vmatpush.msra.mxu0 %v890
        %911 = vmatpush.msra.mxu0 %v889
        %912 = vmatmul.f32.gmra.mxu0 %v762
        %v913 = vpop.f32.mrf.mxu0
        %v914 = vadd.f32 %v895, %v913
        %915 = vdwg.mxu0
        %v916 = vmul.f32 %v914, %v727
        %v917 = vsel %vm785, %v916, 0.0
        %918 = vadd.xlane.f32.xlu0 %v917
        %v919 = vpop.xlane.xlu0 %918
        %v920 = vmul.f32 %v914, %v914
        %v921 = vsel %vm785, %v920, 0.0
        %922 = vadd.xlane.f32.xlu0 %v921
        %v923 = vpop.xlane.xlu0 %922
        %v924 = vrsqrt.pop %v923
        %v925 = vmul.f32 %v924, %v923
        %v926 = vmul.f32 %v925, %v924
        %v927 = vmul.f32 0.5, %v926
        %v928 = vsub.f32 1.5, %v927
        %v929 = vmul.f32 %v924, %v928
        %v930 = vmul.f32 %v923, %v929
        %vm931 = vcmp.eq.f32.partialorder %v923, inf
        %v932 = vsel %vm931, %v923, %v930
        %vm933 = vcmp.eq.f32.partialorder %v923, 0.0
        %v934 = vand.u32 %v923, 2147483648
        %v935 = vsel %vm933, %v934, %v932
        %v936 = vmul.f32 %v935, %v820
        %v937 = vmax.f32 %v936, 1e-06
        %v938 = vrcp.pop %v937
        %v939 = vmax.f32 %v923, 1e-06
        %v940 = vrcp.pop %v939
        %v941 = vmul.f32 %v919, %v938
        %v942 = vmul.f32 %v727, %v938
        %v943 = vmul.f32 %v941, %v914
        %v944 = vmul.f32 %v943, %v940
        %v945 = vsub.f32 %v942, %v944
        %v946 = vsub.f32 0.0, %v945
        %v948 = vsel %vm845, %v946, 0
        %950 = vmatpush.msra.mxu0 0.0
        %951 = vmatpush.msra.mxu0 0.0
        %952 = vmatpush.msra.mxu0 0.0
        %953 = vmatpush.msra.mxu0 0.0
        %954 = vmatpush.msra.mxu0 0.0
        %955 = vmatpush.msra.mxu0 0.0
        %956 = vmatpush.msra.mxu0 0.0
        %957 = vmatpush.msra.mxu0 0.0
        %958 = vmatpush.msra.mxu0 0.0
        %959 = vmatpush.msra.mxu0 0.0
        %960 = vmatpush.msra.mxu0 0.0
        %961 = vmatpush.msra.mxu0 0.0
        %962 = vmatpush.msra.mxu0 0.0
        %963 = vmatpush.msra.mxu0 0.0
        %964 = vmatpush.msra.mxu0 0.0
        %965 = vmatpush.msra.mxu0 %v948
        %966 = vmatmul.f32.gmra.mxu0 %v834
        %v967 = vpop.f32.mrf.mxu0
        %v968 = vadd.f32 0.0, %v967
        %969 = vmatmul.f32.gmra.mxu0 %v837
        %v970 = vpop.f32.mrf.mxu0
        %v971 = vadd.f32 0.0, %v970
        %972 = vmatmul.f32.gmra.mxu0 %v840
        %v973 = vpop.f32.mrf.mxu0
        %v974 = vadd.f32 0.0, %v973
        %975 = vmatmul.f32.gmra.mxu0 %v843
        %v976 = vpop.f32.mrf.mxu0
        %v977 = vadd.f32 0.0, %v976
        %978 = vdwg.mxu0
        %v979 = vsel %vm785, %v946, 0.0
        %v980 = vrot.slane %v979, 4
        %v981 = vadd.f32 %v979, %v980
        %v982 = vrot.slane %v981, 2
        %v983 = vadd.f32 %v981, %v982
        %v984 = vrot.slane %v983, 1
        %v985 = vadd.f32 %v983, %v984
        %v986 = vmul.f32 %v968, 0.3
        %v987 = vmul.f32 %v971, 0.3
        %v988 = vmul.f32 %v974, 0.3
        %v989 = vmul.f32 %v977, 0.3
        %v990 = vsub.f32 %v889, %v986
        %v991 = vsub.f32 %v890, %v987
        %v992 = vsub.f32 %v891, %v988
        %v993 = vsub.f32 %v892, %v989
        %v994 = vmul.f32 %v985, 0.3
        %v995 = vsub.f32 %v894, %v994
        %v996 = vperm.slane %v995, 0
        %997 = vmatpush.msra.mxu0 0.0
        %998 = vmatpush.msra.mxu0 0.0
        %999 = vmatpush.msra.mxu0 0.0
        %1000 = vmatpush.msra.mxu0 0.0
        %1001 = vmatpush.msra.mxu0 0.0
        %1002 = vmatpush.msra.mxu0 0.0
        %1003 = vmatpush.msra.mxu0 0.0
        %1004 = vmatpush.msra.mxu0 0.0
        %1005 = vmatpush.msra.mxu0 0.0
        %1006 = vmatpush.msra.mxu0 0.0
        %1007 = vmatpush.msra.mxu0 0.0
        %1008 = vmatpush.msra.mxu0 0.0
        %1009 = vmatpush.msra.mxu0 %v993
        %1010 = vmatpush.msra.mxu0 %v992
        %1011 = vmatpush.msra.mxu0 %v991
        %1012 = vmatpush.msra.mxu0 %v990
        %1013 = vmatmul.f32.gmra.mxu0 %v762
        %v1014 = vpop.f32.mrf.mxu0
        %v1015 = vadd.f32 %v996, %v1014
        %1016 = vdwg.mxu0
        %v1017 = vmul.f32 %v1015, %v727
        %v1018 = vsel %vm785, %v1017, 0.0
        %1019 = vadd.xlane.f32.xlu0 %v1018
        %v1020 = vpop.xlane.xlu0 %1019
        %v1021 = vmul.f32 %v1015, %v1015
        %v1022 = vsel %vm785, %v1021, 0.0
        %1023 = vadd.xlane.f32.xlu0 %v1022
        %v1024 = vpop.xlane.xlu0 %1023
        %v1025 = vrsqrt.pop %v1024
        %v1026 = vmul.f32 %v1025, %v1024
        %v1027 = vmul.f32 %v1026, %v1025
        %v1028 = vmul.f32 0.5, %v1027
        %v1029 = vsub.f32 1.5, %v1028
        %v1030 = vmul.f32 %v1025, %v1029
        %v1031 = vmul.f32 %v1024, %v1030
        %vm1032 = vcmp.eq.f32.partialorder %v1024, inf
        %v1033 = vsel %vm1032, %v1024, %v1031
        %vm1034 = vcmp.eq.f32.partialorder %v1024, 0.0
        %v1035 = vand.u32 %v1024, 2147483648
        %v1036 = vsel %vm1034, %v1035, %v1033
        %v1037 = vmul.f32 %v1036, %v820
        %v1038 = vmax.f32 %v1037, 1e-06
        %v1039 = vrcp.pop %v1038
        %v1040 = vmax.f32 %v1024, 1e-06
        %v1041 = vrcp.pop %v1040
        %v1042 = vmul.f32 %v1020, %v1039
        %v1043 = vmul.f32 %v727, %v1039
        %v1044 = vmul.f32 %v1042, %v1015
        %v1045 = vmul.f32 %v1044, %v1041
        %v1046 = vsub.f32 %v1043, %v1045
        %v1047 = vsub.f32 0.0, %v1046
        %v1049 = vsel %vm845, %v1047, 0
        %1051 = vmatpush.msra.mxu0 0.0
        %1052 = vmatpush.msra.mxu0 0.0
        %1053 = vmatpush.msra.mxu0 0.0
        %1054 = vmatpush.msra.mxu0 0.0
        %1055 = vmatpush.msra.mxu0 0.0
        %1056 = vmatpush.msra.mxu0 0.0
        %1057 = vmatpush.msra.mxu0 0.0
        %1058 = vmatpush.msra.mxu0 0.0
        %1059 = vmatpush.msra.mxu0 0.0
        %1060 = vmatpush.msra.mxu0 0.0
        %1061 = vmatpush.msra.mxu0 0.0
        %1062 = vmatpush.msra.mxu0 0.0
        %1063 = vmatpush.msra.mxu0 0.0
        %1064 = vmatpush.msra.mxu0 0.0
        %1065 = vmatpush.msra.mxu0 0.0
        %1066 = vmatpush.msra.mxu0 %v1049
        %1067 = vmatmul.f32.gmra.mxu0 %v834
        %v1068 = vpop.f32.mrf.mxu0
        %v1069 = vadd.f32 0.0, %v1068
        %1070 = vmatmul.f32.gmra.mxu0 %v837
        %v1071 = vpop.f32.mrf.mxu0
        %v1072 = vadd.f32 0.0, %v1071
        %1073 = vmatmul.f32.gmra.mxu0 %v840
        %v1074 = vpop.f32.mrf.mxu0
        %v1075 = vadd.f32 0.0, %v1074
        %1076 = vmatmul.f32.gmra.mxu0 %v843
        %v1077 = vpop.f32.mrf.mxu0
        %v1078 = vadd.f32 0.0, %v1077
        %1079 = vdwg.mxu0
        %v1080 = vsel %vm785, %v1047, 0.0
        %v1081 = vrot.slane %v1080, 4
        %v1082 = vadd.f32 %v1080, %v1081
        %v1083 = vrot.slane %v1082, 2
        %v1084 = vadd.f32 %v1082, %v1083
        %v1085 = vrot.slane %v1084, 1
        %v1086 = vadd.f32 %v1084, %v1085
        %v1087 = vmul.f32 %v1069, 0.3
        %v1088 = vmul.f32 %v1072, 0.3
        %v1089 = vmul.f32 %v1075, 0.3
        %v1090 = vmul.f32 %v1078, 0.3
        %v1091 = vsub.f32 %v990, %v1087
        %v1092 = vsub.f32 %v991, %v1088
        %v1093 = vsub.f32 %v992, %v1089
        %v1094 = vsub.f32 %v993, %v1090
        %v1095 = vmul.f32 %v1086, 0.3
        %v1096 = vsub.f32 %v995, %v1095
        %v1097 = vperm.slane %v1096, 0
        %1098 = vmatpush.msra.mxu0 0.0
        %1099 = vmatpush.msra.mxu0 0.0
        %1100 = vmatpush.msra.mxu0 0.0
        %1101 = vmatpush.msra.mxu0 0.0
        %1102 = vmatpush.msra.mxu0 0.0
        %1103 = vmatpush.msra.mxu0 0.0
        %1104 = vmatpush.msra.mxu0 0.0
        %1105 = vmatpush.msra.mxu0 0.0
        %1106 = vmatpush.msra.mxu0 0.0
        %1107 = vmatpush.msra.mxu0 0.0
        %1108 = vmatpush.msra.mxu0 0.0
        %1109 = vmatpush.msra.mxu0 0.0
        %1110 = vmatpush.msra.mxu0 %v1094
        %1111 = vmatpush.msra.mxu0 %v1093
        %1112 = vmatpush.msra.mxu0 %v1092
        %1113 = vmatpush.msra.mxu0 %v1091
        %1114 = vmatmul.f32.gmra.mxu0 %v762
        %v1115 = vpop.f32.mrf.mxu0
        %v1116 = vadd.f32 %v1097, %v1115
        %1117 = vdwg.mxu0
        %v1118 = vmul.f32 %v1116, %v727
        %v1119 = vsel %vm785, %v1118, 0.0
        %1120 = vadd.xlane.f32.xlu0 %v1119
        %v1121 = vpop.xlane.xlu0 %1120
        %v1122 = vmul.f32 %v1116, %v1116
        %v1123 = vsel %vm785, %v1122, 0.0
        %1124 = vadd.xlane.f32.xlu0 %v1123
        %v1125 = vpop.xlane.xlu0 %1124
        %v1126 = vrsqrt.pop %v1125
        %v1127 = vmul.f32 %v1126, %v1125
        %v1128 = vmul.f32 %v1127, %v1126
        %v1129 = vmul.f32 0.5, %v1128
        %v1130 = vsub.f32 1.5, %v1129
        %v1131 = vmul.f32 %v1126, %v1130
        %v1132 = vmul.f32 %v1125, %v1131
        %vm1133 = vcmp.eq.f32.partialorder %v1125, inf
        %v1134 = vsel %vm1133, %v1125, %v1132
        %vm1135 = vcmp.eq.f32.partialorder %v1125, 0.0
        %v1136 = vand.u32 %v1125, 2147483648
        %v1137 = vsel %vm1135, %v1136, %v1134
        %v1138 = vmul.f32 %v1137, %v820
        %v1139 = vmax.f32 %v1138, 1e-06
        %v1140 = vrcp.pop %v1139
        %v1141 = vmax.f32 %v1125, 1e-06
        %v1142 = vrcp.pop %v1141
        %v1143 = vmul.f32 %v1121, %v1140
        %v1144 = vmul.f32 %v727, %v1140
        %v1145 = vmul.f32 %v1143, %v1116
        %v1146 = vmul.f32 %v1145, %v1142
        %v1147 = vsub.f32 %v1144, %v1146
        %v1148 = vsub.f32 0.0, %v1147
        %v1150 = vsel %vm845, %v1148, 0
        %1152 = vmatpush.msra.mxu0 0.0
        %1153 = vmatpush.msra.mxu0 0.0
        %1154 = vmatpush.msra.mxu0 0.0
        %1155 = vmatpush.msra.mxu0 0.0
        %1156 = vmatpush.msra.mxu0 0.0
        %1157 = vmatpush.msra.mxu0 0.0
        %1158 = vmatpush.msra.mxu0 0.0
        %1159 = vmatpush.msra.mxu0 0.0
        %1160 = vmatpush.msra.mxu0 0.0
        %1161 = vmatpush.msra.mxu0 0.0
        %1162 = vmatpush.msra.mxu0 0.0
        %1163 = vmatpush.msra.mxu0 0.0
        %1164 = vmatpush.msra.mxu0 0.0
        %1165 = vmatpush.msra.mxu0 0.0
        %1166 = vmatpush.msra.mxu0 0.0
        %1167 = vmatpush.msra.mxu0 %v1150
        %1168 = vmatmul.f32.gmra.mxu0 %v834
        %v1169 = vpop.f32.mrf.mxu0
        %v1170 = vadd.f32 0.0, %v1169
        %1171 = vmatmul.f32.gmra.mxu0 %v837
        %v1172 = vpop.f32.mrf.mxu0
        %v1173 = vadd.f32 0.0, %v1172
        %1174 = vmatmul.f32.gmra.mxu0 %v840
        %v1175 = vpop.f32.mrf.mxu0
        %v1176 = vadd.f32 0.0, %v1175
        %1177 = vmatmul.f32.gmra.mxu0 %v843
        %v1178 = vpop.f32.mrf.mxu0
        %v1179 = vadd.f32 0.0, %v1178
        %1180 = vdwg.mxu0
        %v1181 = vsel %vm785, %v1148, 0.0
        %v1182 = vrot.slane %v1181, 4
        %v1183 = vadd.f32 %v1181, %v1182
        %v1184 = vrot.slane %v1183, 2
        %v1185 = vadd.f32 %v1183, %v1184
        %v1186 = vrot.slane %v1185, 1
        %v1187 = vadd.f32 %v1185, %v1186
        %v1188 = vmul.f32 %v1170, 0.3
        %v1189 = vmul.f32 %v1173, 0.3
        %v1190 = vmul.f32 %v1176, 0.3
        %v1191 = vmul.f32 %v1179, 0.3
        %v1192 = vsub.f32 %v1091, %v1188
        %v1193 = vsub.f32 %v1092, %v1189
        %v1194 = vsub.f32 %v1093, %v1190
        %v1195 = vsub.f32 %v1094, %v1191
        %v1196 = vmul.f32 %v1187, 0.3
        %v1197 = vsub.f32 %v1096, %v1196
        %v1198 = vperm.slane %v1197, 0
        %1199 = vmatpush.msra.mxu0 0.0
        %1200 = vmatpush.msra.mxu0 0.0
        %1201 = vmatpush.msra.mxu0 0.0
        %1202 = vmatpush.msra.mxu0 0.0
        %1203 = vmatpush.msra.mxu0 0.0
        %1204 = vmatpush.msra.mxu0 0.0
        %1205 = vmatpush.msra.mxu0 0.0
        %1206 = vmatpush.msra.mxu0 0.0
        %1207 = vmatpush.msra.mxu0 0.0
        %1208 = vmatpush.msra.mxu0 0.0
        %1209 = vmatpush.msra.mxu0 0.0
        %1210 = vmatpush.msra.mxu0 0.0
        %1211 = vmatpush.msra.mxu0 %v1195
        %1212 = vmatpush.msra.mxu0 %v1194
        %1213 = vmatpush.msra.mxu0 %v1193
        %1214 = vmatpush.msra.mxu0 %v1192
        %1215 = vmatmul.f32.gmra.mxu0 %v762
        %v1216 = vpop.f32.mrf.mxu0
        %v1217 = vadd.f32 %v1198, %v1216
        %1218 = vdwg.mxu0
        %v1219 = vmul.f32 %v1217, %v727
        %v1220 = vsel %vm785, %v1219, 0.0
        %1221 = vadd.xlane.f32.xlu0 %v1220
        %v1222 = vpop.xlane.xlu0 %1221
        %v1223 = vmul.f32 %v1217, %v1217
        %v1224 = vsel %vm785, %v1223, 0.0
        %1225 = vadd.xlane.f32.xlu0 %v1224
        %v1226 = vpop.xlane.xlu0 %1225
        %v1227 = vrsqrt.pop %v1226
        %v1228 = vmul.f32 %v1227, %v1226
        %v1229 = vmul.f32 %v1228, %v1227
        %v1230 = vmul.f32 0.5, %v1229
        %v1231 = vsub.f32 1.5, %v1230
        %v1232 = vmul.f32 %v1227, %v1231
        %v1233 = vmul.f32 %v1226, %v1232
        %vm1234 = vcmp.eq.f32.partialorder %v1226, inf
        %v1235 = vsel %vm1234, %v1226, %v1233
        %vm1236 = vcmp.eq.f32.partialorder %v1226, 0.0
        %v1237 = vand.u32 %v1226, 2147483648
        %v1238 = vsel %vm1236, %v1237, %v1235
        %v1239 = vmul.f32 %v1238, %v820
        %v1240 = vmax.f32 %v1239, 1e-06
        %v1241 = vrcp.pop %v1240
        %v1242 = vmax.f32 %v1226, 1e-06
        %v1243 = vrcp.pop %v1242
        %v1244 = vmul.f32 %v1222, %v1241
        %v1245 = vmul.f32 %v727, %v1241
        %v1246 = vmul.f32 %v1244, %v1217
        %v1247 = vmul.f32 %v1246, %v1243
        %v1248 = vsub.f32 %v1245, %v1247
        %v1249 = vsub.f32 0.0, %v1248
        %v1251 = vsel %vm845, %v1249, 0
        %1253 = vmatpush.msra.mxu0 0.0
        %1254 = vmatpush.msra.mxu0 0.0
        %1255 = vmatpush.msra.mxu0 0.0
        %1256 = vmatpush.msra.mxu0 0.0
        %1257 = vmatpush.msra.mxu0 0.0
        %1258 = vmatpush.msra.mxu0 0.0
        %1259 = vmatpush.msra.mxu0 0.0
        %1260 = vmatpush.msra.mxu0 0.0
        %1261 = vmatpush.msra.mxu0 0.0
        %1262 = vmatpush.msra.mxu0 0.0
        %1263 = vmatpush.msra.mxu0 0.0
        %1264 = vmatpush.msra.mxu0 0.0
        %1265 = vmatpush.msra.mxu0 0.0
        %1266 = vmatpush.msra.mxu0 0.0
        %1267 = vmatpush.msra.mxu0 0.0
        %1268 = vmatpush.msra.mxu0 %v1251
        %1269 = vmatmul.f32.gmra.mxu0 %v834
        %v1270 = vpop.f32.mrf.mxu0
        %v1271 = vadd.f32 0.0, %v1270
        %1272 = vmatmul.f32.gmra.mxu0 %v837
        %v1273 = vpop.f32.mrf.mxu0
        %v1274 = vadd.f32 0.0, %v1273
        %1275 = vmatmul.f32.gmra.mxu0 %v840
        %v1276 = vpop.f32.mrf.mxu0
        %v1277 = vadd.f32 0.0, %v1276
        %1278 = vmatmul.f32.gmra.mxu0 %v843
        %v1279 = vpop.f32.mrf.mxu0
        %v1280 = vadd.f32 0.0, %v1279
        %1281 = vdwg.mxu0
        %v1282 = vsel %vm785, %v1249, 0.0
        %v1283 = vrot.slane %v1282, 4
        %v1284 = vadd.f32 %v1282, %v1283
        %v1285 = vrot.slane %v1284, 2
        %v1286 = vadd.f32 %v1284, %v1285
        %v1287 = vrot.slane %v1286, 1
        %v1288 = vadd.f32 %v1286, %v1287
        %v1289 = vmul.f32 %v1271, 0.3
        %v1290 = vmul.f32 %v1274, 0.3
        %v1291 = vmul.f32 %v1277, 0.3
        %v1292 = vmul.f32 %v1280, 0.3
        %v1293 = vsub.f32 %v1192, %v1289
        %v1294 = vsub.f32 %v1193, %v1290
        %v1295 = vsub.f32 %v1194, %v1291
        %v1296 = vsub.f32 %v1195, %v1292
        %v1297 = vmul.f32 %v1288, 0.3
        %v1298 = vsub.f32 %v1197, %v1297
        %1299 = vmatpush.msra.mxu0 0.0
        %1300 = vmatpush.msra.mxu0 0.0
        %1301 = vmatpush.msra.mxu0 0.0
        %1302 = vmatpush.msra.mxu0 0.0
        %1303 = vmatpush.msra.mxu0 0.0
        %1304 = vmatpush.msra.mxu0 0.0
        %1305 = vmatpush.msra.mxu0 0.0
        %1306 = vmatpush.msra.mxu0 0.0
        %1307 = vmatpush.msra.mxu0 0.0
        %1308 = vmatpush.msra.mxu0 0.0
        %1309 = vmatpush.msra.mxu0 0.0
        %1310 = vmatpush.msra.mxu0 0.0
        %1311 = vmatpush.msra.mxu0 %v1296
        %1312 = vmatpush.msra.mxu0 %v1295
        %1313 = vmatpush.msra.mxu0 %v1294
        %1314 = vmatpush.msra.mxu0 %v1293
        %1315 = vmatmul.f32.gmra.mxu0 %v570
        %v1316 = vpop.f32.mrf.mxu0
        %v1317 = vadd.f32 %v1298, %v1316
        %1318 = vdwg.mxu0
        %v1319 = vsel %vm725, %v1317, %v435
        %1320 = vst.msk [vmem:[%s205] sm:$0x3] %vm785, %v1319
        %s1321 = sand.u32 %s101, 1
        %s1322 = scalar_lea.sflag [#allocation4], %s1321
        %s1323 = sand.u32 %s101, 1
        %s1324 = smul.addr %s1323, 2
        %s1325 = scalar_lea.vmem [#allocation5], %s1324
        // Predicated region
        $region37: #{tpu_custom_call.1} parent=31 // pred_check
          %p1326 = pneg %p111
        $region38: #{tpu_custom_call.1} parent=31 // pred_check_branch
          %1328 = sbr.rel (%p1326) target = $region40
        $region39: #{tpu_custom_call.1} parent=31 // pred_region
          %1330 = vsyncadd %s1322, 0
          %s1331 = smul.addr %s20, 2
          %s1332 = scalar_lea.hbm %s3, %s1331
          %s1334 = sshll.u32 %s1325, 4
          %s1335 = int_to_ptr.vmem [resolvable:$true] %s1334
          %s1336 = sshll.u32 %s1332, 4
          %s1337 = int_to_ptr.hbm [resolvable:$true] %s1336
          %1339 = dma.vmem_to_hbm [thread:$0]  %s1335, 32, %s1337, %s1322
        $region40: #{tpu_custom_call.1} parent=31 // pred_fallthru
          _
      $region32: #{tpu_custom_call.1} parent=5 // pred_fallthru
        _
      %p1340 = scmp.le.s32.totalorder 2, %s15
      // Predicated region
      $region41: #{tpu_custom_call.1} parent=5 // pred_check
        %p1341 = pneg %p1340
      $region42: #{tpu_custom_call.1} parent=5 // pred_check_branch
        %1343 = sbr.rel (%p1341) target = $region44
      $region43: #{tpu_custom_call.1} parent=5 // pred_region
        %s1344 = ssub.s32 %s15, 2
        // Predicated region
        $region45: #{tpu_custom_call.1} parent=43 // pred_check
          %p1345 = pneg %p117
        $region46: #{tpu_custom_call.1} parent=43 // pred_check_branch
          %1347 = sbr.rel (%p1345) target = $region48
        $region47: #{tpu_custom_call.1} parent=43 // pred_region
          %s1348 = sand.u32 %s102, 1
          %s1349 = scalar_lea.sflag [#allocation4], %s1348
          %s1350 = sand.u32 %s102, 1
          %s1351 = smul.addr %s1350, 2
          %s1352 = scalar_lea.vmem [#allocation5], %s1351
          %1354 = dma.done %s1349, 32
        $region48: #{tpu_custom_call.1} parent=43 // pred_fallthru
          _
      $region44: #{tpu_custom_call.1} parent=5 // pred_fallthru
        _
    $region6: #{tpu_custom_call.1} parent=1 // loop_footer
      %s19 = sadd.s32 1, %s15
    $region7: #{tpu_custom_call.1} parent=1 // loop_footer_branch
      %14 = sbr.rel target = $region3
    $region8: #{tpu_custom_call.1} parent=1 // loop_exit
      _
    %1355 = vsyncpa [#allocation3], 1
    %s1356 = scalar_lea.sflag [#allocation3], 1
    %1357 = vsyncpa %s1356, 1
    %1358 = vsyncpa [#allocation4], 1
    %s1359 = scalar_lea.sflag [#allocation4], 1
    %1360 = vsyncpa %s1359, 1

</llo_original>
